<compile_context>
chip_gen: v7x
topology: tpu7x:2x2x1
jax: 0.10.0
libtpu: 0.0.40
codegen_flags: <defaults>
</compile_context>

<pallas_src>
import functools

import jax
import jax.numpy as jnp
from jax import lax
from jax.experimental import pallas as pl
from jax.experimental.pallas import tpu as pltpu  # noqa: F401 (kept for clarity)

PAD_ID = 0  # padding_value used by pad_packed_sequence in the reference code


# ----------------------------------------------------------------------------
# Pallas kernel: one GRU layer, time-major, packed-sequence semantics
# (hidden frozen past each sequence's length, padded outputs set to PAD_ID).
# Single invocation; the time recurrence is a fully-unrolled static loop.
# ----------------------------------------------------------------------------
def gru_kernel(
    x_ref,      # (S*B, E)  embedded inputs, time-major flattened (f32 or bf16)
    lens_ref,   # (B, 1)    int32 sequence lengths
    wih_ref,    # (E, 3H)   input->gates weight (transposed; gate cols r|z|n)
    whh_ref,    # (H, 3H)   hidden->gates weight (transposed; gate cols r|z|n)
    bih_ref,    # (1, 3H)   input bias (f32)
    bhh_ref,    # (1, 3H)   hidden bias (f32)
    out_ref,    # (S, B, H) outputs (f32)
    hN_ref,     # (1, B, H) final hidden state (f32)
):
    S, B, H = out_ref.shape
    H2 = 2 * H

    # Input projection for ALL timesteps at once (hoisted out of recurrence).
    # Kept as a plain value -- no VMEM scratch round-trip.
    gx_all = (
        jnp.dot(x_ref[...], wih_ref[...], preferred_element_type=jnp.float32)
        + bih_ref[...]
    )                                                      # (S*B, 3H) f32

    whh = whh_ref[...]                                     # (H, 3H) hoisted load
    bhh = bhh_ref[...]                                     # (1, 3H)
    mxu_dtype = whh.dtype                                  # f32 or bf16 operands

    # Validity mask hoisted out of the recurrence: (S, B, 1) bool.
    t_iota = lax.broadcasted_iota(jnp.int32, (S, B, 1), 0)
    valid_all = t_iota < lens_ref[...][None, :, :]

    h = jnp.zeros((B, H), jnp.float32)
    # Fully unrolled static time loop (S is small); every slice index below is
    # static, so no dynamic-slice / scratch traffic on the serial chain.
    for t in range(S):
        gx = gx_all[t * B:(t + 1) * B, :]                  # (B, 3H), gates r|z|n
        gh = (
            jnp.dot(h.astype(mxu_dtype), whh,
                    preferred_element_type=jnp.float32)
            + bhh
        )                                                  # (B, 3H) f32

        # One sigmoid (single EUP push) covering both r and z gates.
        rz = jax.nn.sigmoid(gx[:, :H2] + gh[:, :H2])       # (B, 2H)
        r = rz[:, :H]
        z = rz[:, H:]
        n = jnp.tanh(gx[:, H2:] + r * gh[:, H2:])
        h_cand = (1.0 - z) * n + z * h

        valid = valid_all[t]                               # (B, 1) bool, static slice
        h = jnp.where(valid, h_cand, h)                    # freeze past length
        out_ref[t] = jnp.where(valid, h_cand, jnp.float32(PAD_ID))

    hN_ref[0] = h


def gru_pallas(x_emb, lengths, w_ih, w_hh, b_ih, b_hh, *, mxu_dtype=jnp.float32):
    """x_emb: (S, B, E) f32; lengths: (B,) int; PyTorch-layout GRU params.

    mxu_dtype: dtype of the MXU operands (f32 = bit-faithful; bf16 recommended
    on v6e / v7x, accumulation stays f32 either way).
    """
    S, B, E = x_emb.shape
    H = w_hh.shape[1]

    # Fuse PyTorch (3H, *) params into single wide, pre-transposed refs.
    wih_t = w_ih.T.astype(mxu_dtype)                 # (E, 3H), gate cols r|z|n
    whh_t = w_hh.T.astype(mxu_dtype)                 # (H, 3H)
    bih = b_ih[None, :].astype(jnp.float32)          # (1, 3H)
    bhh = b_hh[None, :].astype(jnp.float32)          # (1, 3H)

    x2d = x_emb.reshape(S * B, E).astype(mxu_dtype)  # free wrapper-side reshape
    lens2d = lengths.astype(jnp.int32)[:, None]      # (B, 1)

    outputs, h_n = pl.pallas_call(
        gru_kernel,
        out_shape=(
            jax.ShapeDtypeStruct((S, B, H), jnp.float32),
            jax.ShapeDtypeStruct((1, B, H), jnp.float32),
        ),
    )(x2d, lens2d, wih_t, whh_t, bih, bhh)
    return outputs, h_n


# ----------------------------------------------------------------------------
# NormalEncoder forward (sort=True path: lengths sorted descending, as
# required by pack_padded_sequence).
# ----------------------------------------------------------------------------
def normal_encoder_forward(inputs, lengths, embedding_table, w_ih, w_hh, b_ih,
                           b_hh, mxu_dtype=jnp.float32):
    """inputs: (S, B) int32 token ids; lengths: (B,) int32 (sorted descending).

    Returns:
      outputs:      (S, B, num_directions*H)           -- here (S, B, H)
      hidden_state: (num_layers*num_directions, B, H)  -- here (1, B, H)
    """
    # Embedding lookup (gather) -- glue, done in plain JAX.
    embedded = embedding_table[inputs]               # (S, B, E) f32
    # TODO(synk): train-mode dropout not implemented (config.dropout=0.0 / eval => identity).
    outputs, h_n = gru_pallas(embedded, lengths, w_ih, w_hh, b_ih, b_hh,
                              mxu_dtype=mxu_dtype)
    return outputs, h_n


# ----------------------------------------------------------------------------
# Pure-JAX reference (lax.scan GRU) used to validate the kernel.
# ----------------------------------------------------------------------------
def gru_reference(x_emb, mask, w_ih, w_hh, b_ih, b_hh):
    S, B, E = x_emb.shape
    H = w_hh.shape[1]

    def step(h, inp):
        x_t, m = inp
        gx = x_t @ w_ih.T + b_ih
        gh = h @ w_hh.T + b_hh
        r = jax.nn.sigmoid(gx[:, :H] + gh[:, :H])
        z = jax.nn.sigmoid(gx[:, H:2 * H] + gh[:, H:2 * H])
        n = jnp.tanh(gx[:, 2 * H:] + r * gh[:, 2 * H:])
        h_cand = (1.0 - z) * n + z * h
        valid = m > 0.5
        h_new = jnp.where(valid, h_cand, h)
        out = jnp.where(valid, h_cand, jnp.float32(PAD_ID))
        return h_new, out

    h0 = jnp.zeros((B, H), jnp.float32)
    h_n, outs = lax.scan(step, h0, (x_emb, mask))
    return outs, h_n[None]


if __name__ == "__main__":
    # Small, deterministic problem.
    SEQ_LEN, BATCH = 8, 8
    VOCAB, EMB, HIDDEN = 64, 32, 32

    key = jax.random.PRNGKey(0)
    k_emb, k_wih, k_whh, k_bih, k_bhh, k_tok = jax.random.split(key, 6)

    # Deterministic synthetic parameters (PyTorch GRU param layout: gates r,z,n).
    embedding_table = jax.random.normal(k_emb, (VOCAB, EMB), jnp.float32) * 0.1
    w_ih = jax.random.normal(k_wih, (3 * HIDDEN, EMB), jnp.float32) * 0.1
    w_hh = jax.random.normal(k_whh, (3 * HIDDEN, HIDDEN), jnp.float32) * 0.1
    b_ih = jax.random.normal(k_bih, (3 * HIDDEN,), jnp.float32) * 0.1
    b_hh = jax.random.normal(k_bhh, (3 * HIDDEN,), jnp.float32) * 0.1

    # inputs: [seq_len, batch] token ids; lengths sorted descending (sort=True path).
    inputs = jax.random.randint(k_tok, (SEQ_LEN, BATCH), 1, VOCAB, dtype=jnp.int32)
    lengths = jnp.array([8, 7, 6, 5, 4, 3, 2, 1], dtype=jnp.int32)

    fwd = jax.jit(normal_encoder_forward, static_argnames=("mxu_dtype",))

    # --- f32 MXU-operand path (bit-faithful; default / v5e) -----------------
    outputs, hidden_state = fwd(inputs, lengths, embedding_table, w_ih, w_hh,
                                b_ih, b_hh, mxu_dtype=jnp.float32)
    outputs = jax.block_until_ready(outputs)
    hidden_state = jax.block_until_ready(hidden_state)

    # Validate against pure-JAX reference.
    t_idx = jnp.arange(SEQ_LEN, dtype=jnp.int32)[:, None]
    mask = (t_idx < lengths[None, :]).astype(jnp.float32)[..., None]
    ref_out, ref_h = gru_reference(embedding_table[inputs], mask, w_ih, w_hh,
                                   b_ih, b_hh)

    assert outputs.shape == (SEQ_LEN, BATCH, HIDDEN)
    assert hidden_state.shape == (1, BATCH, HIDDEN)
    assert jnp.allclose(outputs, ref_out, atol=1e-5, rtol=1e-5)
    assert jnp.allclose(hidden_state, ref_h, atol=1e-5, rtol=1e-5)

    # --- bf16 MXU-operand path (recommended on v6e / v7x) -------------------
    outputs_bf16, hidden_bf16 = fwd(inputs, lengths, embedding_table, w_ih,
                                    w_hh, b_ih, b_hh, mxu_dtype=jnp.bfloat16)
    outputs_bf16 = jax.block_until_ready(outputs_bf16)
    hidden_bf16 = jax.block_until_ready(hidden_bf16)
    assert jnp.allclose(outputs_bf16, ref_out, atol=2e-2, rtol=2e-2)
    assert jnp.allclose(hidden_bf16, ref_h, atol=2e-2, rtol=2e-2)

    print("KERNEL_OK")
</pallas_src>

<mosaic_0001>
module attributes {stable_mosaic.version = 11 : i64} {
  func.func @gru_kernel(%arg0: memref<64x32xf32, #tpu.memory_space<vmem>>, %arg1: memref<8x1xi32, #tpu.memory_space<vmem>>, %arg2: memref<32x96xf32, #tpu.memory_space<vmem>>, %arg3: memref<32x96xf32, #tpu.memory_space<vmem>>, %arg4: memref<1x96xf32, #tpu.memory_space<vmem>>, %arg5: memref<1x96xf32, #tpu.memory_space<vmem>>, %arg6: memref<8x8x32xf32, #tpu.memory_space<vmem>>, %arg7: memref<1x8x32xf32, #tpu.memory_space<vmem>>) attributes {dimension_semantics = [], scalar_prefetch = 0 : i64, scratch_operands = 0 : i64, tpu.core_type = #tpu.core_type<tc>} {
    %c0 = arith.constant 0 : index
    %c0_0 = arith.constant 0 : index
    %0 = vector.load %arg0[%c0, %c0_0] : memref<64x32xf32, #tpu.memory_space<vmem>>, vector<64x32xf32>
    %c0_1 = arith.constant 0 : index
    %c0_2 = arith.constant 0 : index
    %1 = vector.load %arg2[%c0_1, %c0_2] : memref<32x96xf32, #tpu.memory_space<vmem>>, vector<32x96xf32>
    %cst = arith.constant dense<0.000000e+00> : vector<64x96xf32>
    %2 = tpu.matmul %0, %1, %cst {dimension_numbers = #tpu.dot_dimension_numbers<[1], [0], [0], [1], [0, 0, 1, 1], [], []>} : vector<64x32xf32>, vector<32x96xf32>, vector<64x96xf32> -> vector<64x96xf32>
    %c0_3 = arith.constant 0 : index
    %c0_4 = arith.constant 0 : index
    %3 = vector.load %arg4[%c0_3, %c0_4] : memref<1x96xf32, #tpu.memory_space<vmem>>, vector<1x96xf32>
    %4 = vector.broadcast %3 : vector<1x96xf32> to vector<64x96xf32>
    %5 = arith.addf %2, %4 : vector<64x96xf32>
    %c0_5 = arith.constant 0 : index
    %c0_6 = arith.constant 0 : index
    %6 = vector.load %arg3[%c0_5, %c0_6] : memref<32x96xf32, #tpu.memory_space<vmem>>, vector<32x96xf32>
    %c0_7 = arith.constant 0 : index
    %c0_8 = arith.constant 0 : index
    %7 = vector.load %arg5[%c0_7, %c0_8] : memref<1x96xf32, #tpu.memory_space<vmem>>, vector<1x96xf32>
    %8 = tpu.iota {dimensions = array<i32: 0>} : vector<8x8x1xi32>
    %c0_9 = arith.constant 0 : index
    %c0_10 = arith.constant 0 : index
    %9 = vector.load %arg1[%c0_9, %c0_10] : memref<8x1xi32, #tpu.memory_space<vmem>>, vector<8x1xi32>
    %10 = vector.shape_cast %9 : vector<8x1xi32> to vector<1x8x1xi32>
    %11 = vector.broadcast %10 : vector<1x8x1xi32> to vector<8x8x1xi32>
    %12 = arith.cmpi slt, %8, %11 : vector<8x8x1xi32>
    %cst_11 = arith.constant 0.000000e+00 : f32
    %13 = vector.broadcast %cst_11 : f32 to vector<8x32xf32>
    %14 = vector.extract_strided_slice %5 {offsets = [0, 0], sizes = [8, 96], strides = [1, 1]} : vector<64x96xf32> to vector<8x96xf32>
    %cst_12 = arith.constant dense<0.000000e+00> : vector<8x96xf32>
    %15 = tpu.matmul %13, %6, %cst_12 {dimension_numbers = #tpu.dot_dimension_numbers<[1], [0], [0], [1], [0, 0, 1, 1], [], []>} : vector<8x32xf32>, vector<32x96xf32>, vector<8x96xf32> -> vector<8x96xf32>
    %16 = vector.broadcast %7 : vector<1x96xf32> to vector<8x96xf32>
    %17 = arith.addf %15, %16 : vector<8x96xf32>
    %18 = vector.extract_strided_slice %14 {offsets = [0, 0], sizes = [8, 64], strides = [1, 1]} : vector<8x96xf32> to vector<8x64xf32>
    %19 = vector.extract_strided_slice %17 {offsets = [0, 0], sizes = [8, 64], strides = [1, 1]} : vector<8x96xf32> to vector<8x64xf32>
    %20 = arith.addf %18, %19 : vector<8x64xf32>
    %21 = arith.negf %20 : vector<8x64xf32>
    %22 = math.exp %21 : vector<8x64xf32>
    %cst_13 = arith.constant 1.000000e+00 : f32
    %23 = vector.broadcast %cst_13 : f32 to vector<8x64xf32>
    %24 = arith.addf %23, %22 : vector<8x64xf32>
    %25 = arith.divf %23, %24 : vector<8x64xf32>
    %26 = vector.extract_strided_slice %25 {offsets = [0, 0], sizes = [8, 32], strides = [1, 1]} : vector<8x64xf32> to vector<8x32xf32>
    %27 = vector.extract_strided_slice %25 {offsets = [0, 32], sizes = [8, 32], strides = [1, 1]} : vector<8x64xf32> to vector<8x32xf32>
    %28 = vector.extract_strided_slice %14 {offsets = [0, 64], sizes = [8, 32], strides = [1, 1]} : vector<8x96xf32> to vector<8x32xf32>
    %29 = vector.extract_strided_slice %17 {offsets = [0, 64], sizes = [8, 32], strides = [1, 1]} : vector<8x96xf32> to vector<8x32xf32>
    %30 = arith.mulf %26, %29 : vector<8x32xf32>
    %31 = arith.addf %28, %30 : vector<8x32xf32>
    %32 = math.tanh %31 : vector<8x32xf32>
    %cst_14 = arith.constant 1.000000e+00 : f32
    %33 = vector.broadcast %cst_14 : f32 to vector<8x32xf32>
    %34 = arith.subf %33, %27 : vector<8x32xf32>
    %35 = arith.mulf %34, %32 : vector<8x32xf32>
    %36 = arith.mulf %27, %13 : vector<8x32xf32>
    %37 = arith.addf %35, %36 : vector<8x32xf32>
    %38 = vector.extract_strided_slice %12 {offsets = [0, 0, 0], sizes = [1, 8, 1], strides = [1, 1, 1]} : vector<8x8x1xi1> to vector<1x8x1xi1>
    %39 = vector.shape_cast %38 : vector<1x8x1xi1> to vector<8x1xi1>
    %40 = vector.shape_cast %39 : vector<8x1xi1> to vector<8x1xi1>
    %41 = vector.broadcast %40 : vector<8x1xi1> to vector<8x32xi1>
    %42 = arith.select %41, %37, %13 : vector<8x32xi1>, vector<8x32xf32>
    %cst_15 = arith.constant 0.000000e+00 : f32
    %43 = vector.shape_cast %39 : vector<8x1xi1> to vector<8x1xi1>
    %44 = vector.broadcast %43 : vector<8x1xi1> to vector<8x32xi1>
    %45 = vector.broadcast %cst_15 : f32 to vector<8x32xf32>
    %46 = arith.select %44, %37, %45 : vector<8x32xi1>, vector<8x32xf32>
    %c0_16 = arith.constant 0 : index
    %c0_17 = arith.constant 0 : index
    %c0_18 = arith.constant 0 : index
    %47 = vector.load %arg6[%c0_16, %c0_17, %c0_18] : memref<8x8x32xf32, #tpu.memory_space<vmem>>, vector<1x8x32xf32>
    %48 = vector.shape_cast %47 : vector<1x8x32xf32> to vector<8x32xf32>
    %49 = vector.shape_cast %46 : vector<8x32xf32> to vector<1x8x32xf32>
    tpu.vector_store %arg6[%c0_16, %c0_17, %c0_18], %49 {strides = array<i32>} : memref<8x8x32xf32, #tpu.memory_space<vmem>>, vector<1x8x32xf32>,
    %50 = vector.extract_strided_slice %5 {offsets = [8, 0], sizes = [8, 96], strides = [1, 1]} : vector<64x96xf32> to vector<8x96xf32>
    %cst_19 = arith.constant dense<0.000000e+00> : vector<8x96xf32>
    %51 = tpu.matmul %42, %6, %cst_19 {dimension_numbers = #tpu.dot_dimension_numbers<[1], [0], [0], [1], [0, 0, 1, 1], [], []>} : vector<8x32xf32>, vector<32x96xf32>, vector<8x96xf32> -> vector<8x96xf32>
    %52 = vector.broadcast %7 : vector<1x96xf32> to vector<8x96xf32>
    %53 = arith.addf %51, %52 : vector<8x96xf32>
    %54 = vector.extract_strided_slice %50 {offsets = [0, 0], sizes = [8, 64], strides = [1, 1]} : vector<8x96xf32> to vector<8x64xf32>
    %55 = vector.extract_strided_slice %53 {offsets = [0, 0], sizes = [8, 64], strides = [1, 1]} : vector<8x96xf32> to vector<8x64xf32>
    %56 = arith.addf %54, %55 : vector<8x64xf32>
    %57 = arith.negf %56 : vector<8x64xf32>
    %58 = math.exp %57 : vector<8x64xf32>
    %cst_20 = arith.constant 1.000000e+00 : f32
    %59 = vector.broadcast %cst_20 : f32 to vector<8x64xf32>
    %60 = arith.addf %59, %58 : vector<8x64xf32>
    %61 = arith.divf %59, %60 : vector<8x64xf32>
    %62 = vector.extract_strided_slice %61 {offsets = [0, 0], sizes = [8, 32], strides = [1, 1]} : vector<8x64xf32> to vector<8x32xf32>
    %63 = vector.extract_strided_slice %61 {offsets = [0, 32], sizes = [8, 32], strides = [1, 1]} : vector<8x64xf32> to vector<8x32xf32>
    %64 = vector.extract_strided_slice %50 {offsets = [0, 64], sizes = [8, 32], strides = [1, 1]} : vector<8x96xf32> to vector<8x32xf32>
    %65 = vector.extract_strided_slice %53 {offsets = [0, 64], sizes = [8, 32], strides = [1, 1]} : vector<8x96xf32> to vector<8x32xf32>
    %66 = arith.mulf %62, %65 : vector<8x32xf32>
    %67 = arith.addf %64, %66 : vector<8x32xf32>
    %68 = math.tanh %67 : vector<8x32xf32>
    %cst_21 = arith.constant 1.000000e+00 : f32
    %69 = vector.broadcast %cst_21 : f32 to vector<8x32xf32>
    %70 = arith.subf %69, %63 : vector<8x32xf32>
    %71 = arith.mulf %70, %68 : vector<8x32xf32>
    %72 = arith.mulf %63, %42 : vector<8x32xf32>
    %73 = arith.addf %71, %72 : vector<8x32xf32>
    %74 = vector.extract_strided_slice %12 {offsets = [1, 0, 0], sizes = [1, 8, 1], strides = [1, 1, 1]} : vector<8x8x1xi1> to vector<1x8x1xi1>
    %75 = vector.shape_cast %74 : vector<1x8x1xi1> to vector<8x1xi1>
    %76 = vector.shape_cast %75 : vector<8x1xi1> to vector<8x1xi1>
    %77 = vector.broadcast %76 : vector<8x1xi1> to vector<8x32xi1>
    %78 = arith.select %77, %73, %42 : vector<8x32xi1>, vector<8x32xf32>
    %cst_22 = arith.constant 0.000000e+00 : f32
    %79 = vector.shape_cast %75 : vector<8x1xi1> to vector<8x1xi1>
    %80 = vector.broadcast %79 : vector<8x1xi1> to vector<8x32xi1>
    %81 = vector.broadcast %cst_22 : f32 to vector<8x32xf32>
    %82 = arith.select %80, %73, %81 : vector<8x32xi1>, vector<8x32xf32>
    %c1 = arith.constant 1 : index
    %c0_23 = arith.constant 0 : index
    %c0_24 = arith.constant 0 : index
    %83 = vector.load %arg6[%c1, %c0_23, %c0_24] : memref<8x8x32xf32, #tpu.memory_space<vmem>>, vector<1x8x32xf32>
    %84 = vector.shape_cast %83 : vector<1x8x32xf32> to vector<8x32xf32>
    %85 = vector.shape_cast %82 : vector<8x32xf32> to vector<1x8x32xf32>
    tpu.vector_store %arg6[%c1, %c0_23, %c0_24], %85 {strides = array<i32>} : memref<8x8x32xf32, #tpu.memory_space<vmem>>, vector<1x8x32xf32>,
    %86 = vector.extract_strided_slice %5 {offsets = [16, 0], sizes = [8, 96], strides = [1, 1]} : vector<64x96xf32> to vector<8x96xf32>
    %cst_25 = arith.constant dense<0.000000e+00> : vector<8x96xf32>
    %87 = tpu.matmul %78, %6, %cst_25 {dimension_numbers = #tpu.dot_dimension_numbers<[1], [0], [0], [1], [0, 0, 1, 1], [], []>} : vector<8x32xf32>, vector<32x96xf32>, vector<8x96xf32> -> vector<8x96xf32>
    %88 = vector.broadcast %7 : vector<1x96xf32> to vector<8x96xf32>
    %89 = arith.addf %87, %88 : vector<8x96xf32>
    %90 = vector.extract_strided_slice %86 {offsets = [0, 0], sizes = [8, 64], strides = [1, 1]} : vector<8x96xf32> to vector<8x64xf32>
    %91 = vector.extract_strided_slice %89 {offsets = [0, 0], sizes = [8, 64], strides = [1, 1]} : vector<8x96xf32> to vector<8x64xf32>
    %92 = arith.addf %90, %91 : vector<8x64xf32>
    %93 = arith.negf %92 : vector<8x64xf32>
    %94 = math.exp %93 : vector<8x64xf32>
    %cst_26 = arith.constant 1.000000e+00 : f32
    %95 = vector.broadcast %cst_26 : f32 to vector<8x64xf32>
    %96 = arith.addf %95, %94 : vector<8x64xf32>
    %97 = arith.divf %95, %96 : vector<8x64xf32>
    %98 = vector.extract_strided_slice %97 {offsets = [0, 0], sizes = [8, 32], strides = [1, 1]} : vector<8x64xf32> to vector<8x32xf32>
    %99 = vector.extract_strided_slice %97 {offsets = [0, 32], sizes = [8, 32], strides = [1, 1]} : vector<8x64xf32> to vector<8x32xf32>
    %100 = vector.extract_strided_slice %86 {offsets = [0, 64], sizes = [8, 32], strides = [1, 1]} : vector<8x96xf32> to vector<8x32xf32>
    %101 = vector.extract_strided_slice %89 {offsets = [0, 64], sizes = [8, 32], strides = [1, 1]} : vector<8x96xf32> to vector<8x32xf32>
    %102 = arith.mulf %98, %101 : vector<8x32xf32>
    %103 = arith.addf %100, %102 : vector<8x32xf32>
    %104 = math.tanh %103 : vector<8x32xf32>
    %cst_27 = arith.constant 1.000000e+00 : f32
    %105 = vector.broadcast %cst_27 : f32 to vector<8x32xf32>
    %106 = arith.subf %105, %99 : vector<8x32xf32>
    %107 = arith.mulf %106, %104 : vector<8x32xf32>
    %108 = arith.mulf %99, %78 : vector<8x32xf32>
    %109 = arith.addf %107, %108 : vector<8x32xf32>
    %110 = vector.extract_strided_slice %12 {offsets = [2, 0, 0], sizes = [1, 8, 1], strides = [1, 1, 1]} : vector<8x8x1xi1> to vector<1x8x1xi1>
    %111 = vector.shape_cast %110 : vector<1x8x1xi1> to vector<8x1xi1>
    %112 = vector.shape_cast %111 : vector<8x1xi1> to vector<8x1xi1>
    %113 = vector.broadcast %112 : vector<8x1xi1> to vector<8x32xi1>
    %114 = arith.select %113, %109, %78 : vector<8x32xi1>, vector<8x32xf32>
    %cst_28 = arith.constant 0.000000e+00 : f32
    %115 = vector.shape_cast %111 : vector<8x1xi1> to vector<8x1xi1>
    %116 = vector.broadcast %115 : vector<8x1xi1> to vector<8x32xi1>
    %117 = vector.broadcast %cst_28 : f32 to vector<8x32xf32>
    %118 = arith.select %116, %109, %117 : vector<8x32xi1>, vector<8x32xf32>
    %c2 = arith.constant 2 : index
    %c0_29 = arith.constant 0 : index
    %c0_30 = arith.constant 0 : index
    %119 = vector.load %arg6[%c2, %c0_29, %c0_30] : memref<8x8x32xf32, #tpu.memory_space<vmem>>, vector<1x8x32xf32>
    %120 = vector.shape_cast %119 : vector<1x8x32xf32> to vector<8x32xf32>
    %121 = vector.shape_cast %118 : vector<8x32xf32> to vector<1x8x32xf32>
    tpu.vector_store %arg6[%c2, %c0_29, %c0_30], %121 {strides = array<i32>} : memref<8x8x32xf32, #tpu.memory_space<vmem>>, vector<1x8x32xf32>,
    %122 = vector.extract_strided_slice %5 {offsets = [24, 0], sizes = [8, 96], strides = [1, 1]} : vector<64x96xf32> to vector<8x96xf32>
    %cst_31 = arith.constant dense<0.000000e+00> : vector<8x96xf32>
    %123 = tpu.matmul %114, %6, %cst_31 {dimension_numbers = #tpu.dot_dimension_numbers<[1], [0], [0], [1], [0, 0, 1, 1], [], []>} : vector<8x32xf32>, vector<32x96xf32>, vector<8x96xf32> -> vector<8x96xf32>
    %124 = vector.broadcast %7 : vector<1x96xf32> to vector<8x96xf32>
    %125 = arith.addf %123, %124 : vector<8x96xf32>
    %126 = vector.extract_strided_slice %122 {offsets = [0, 0], sizes = [8, 64], strides = [1, 1]} : vector<8x96xf32> to vector<8x64xf32>
    %127 = vector.extract_strided_slice %125 {offsets = [0, 0], sizes = [8, 64], strides = [1, 1]} : vector<8x96xf32> to vector<8x64xf32>
    %128 = arith.addf %126, %127 : vector<8x64xf32>
    %129 = arith.negf %128 : vector<8x64xf32>
    %130 = math.exp %129 : vector<8x64xf32>
    %cst_32 = arith.constant 1.000000e+00 : f32
    %131 = vector.broadcast %cst_32 : f32 to vector<8x64xf32>
    %132 = arith.addf %131, %130 : vector<8x64xf32>
    %133 = arith.divf %131, %132 : vector<8x64xf32>
    %134 = vector.extract_strided_slice %133 {offsets = [0, 0], sizes = [8, 32], strides = [1, 1]} : vector<8x64xf32> to vector<8x32xf32>
    %135 = vector.extract_strided_slice %133 {offsets = [0, 32], sizes = [8, 32], strides = [1, 1]} : vector<8x64xf32> to vector<8x32xf32>
    %136 = vector.extract_strided_slice %122 {offsets = [0, 64], sizes = [8, 32], strides = [1, 1]} : vector<8x96xf32> to vector<8x32xf32>
    %137 = vector.extract_strided_slice %125 {offsets = [0, 64], sizes = [8, 32], strides = [1, 1]} : vector<8x96xf32> to vector<8x32xf32>
    %138 = arith.mulf %134, %137 : vector<8x32xf32>
    %139 = arith.addf %136, %138 : vector<8x32xf32>
    %140 = math.tanh %139 : vector<8x32xf32>
    %cst_33 = arith.constant 1.000000e+00 : f32
    %141 = vector.broadcast %cst_33 : f32 to vector<8x32xf32>
    %142 = arith.subf %141, %135 : vector<8x32xf32>
    %143 = arith.mulf %142, %140 : vector<8x32xf32>
    %144 = arith.mulf %135, %114 : vector<8x32xf32>
    %145 = arith.addf %143, %144 : vector<8x32xf32>
    %146 = vector.extract_strided_slice %12 {offsets = [3, 0, 0], sizes = [1, 8, 1], strides = [1, 1, 1]} : vector<8x8x1xi1> to vector<1x8x1xi1>
    %147 = vector.shape_cast %146 : vector<1x8x1xi1> to vector<8x1xi1>
    %148 = vector.shape_cast %147 : vector<8x1xi1> to vector<8x1xi1>
    %149 = vector.broadcast %148 : vector<8x1xi1> to vector<8x32xi1>
    %150 = arith.select %149, %145, %114 : vector<8x32xi1>, vector<8x32xf32>
    %cst_34 = arith.constant 0.000000e+00 : f32
    %151 = vector.shape_cast %147 : vector<8x1xi1> to vector<8x1xi1>
    %152 = vector.broadcast %151 : vector<8x1xi1> to vector<8x32xi1>
    %153 = vector.broadcast %cst_34 : f32 to vector<8x32xf32>
    %154 = arith.select %152, %145, %153 : vector<8x32xi1>, vector<8x32xf32>
    %c3 = arith.constant 3 : index
    %c0_35 = arith.constant 0 : index
    %c0_36 = arith.constant 0 : index
    %155 = vector.load %arg6[%c3, %c0_35, %c0_36] : memref<8x8x32xf32, #tpu.memory_space<vmem>>, vector<1x8x32xf32>
    %156 = vector.shape_cast %155 : vector<1x8x32xf32> to vector<8x32xf32>
    %157 = vector.shape_cast %154 : vector<8x32xf32> to vector<1x8x32xf32>
    tpu.vector_store %arg6[%c3, %c0_35, %c0_36], %157 {strides = array<i32>} : memref<8x8x32xf32, #tpu.memory_space<vmem>>, vector<1x8x32xf32>,
    %158 = vector.extract_strided_slice %5 {offsets = [32, 0], sizes = [8, 96], strides = [1, 1]} : vector<64x96xf32> to vector<8x96xf32>
    %cst_37 = arith.constant dense<0.000000e+00> : vector<8x96xf32>
    %159 = tpu.matmul %150, %6, %cst_37 {dimension_numbers = #tpu.dot_dimension_numbers<[1], [0], [0], [1], [0, 0, 1, 1], [], []>} : vector<8x32xf32>, vector<32x96xf32>, vector<8x96xf32> -> vector<8x96xf32>
    %160 = vector.broadcast %7 : vector<1x96xf32> to vector<8x96xf32>
    %161 = arith.addf %159, %160 : vector<8x96xf32>
    %162 = vector.extract_strided_slice %158 {offsets = [0, 0], sizes = [8, 64], strides = [1, 1]} : vector<8x96xf32> to vector<8x64xf32>
    %163 = vector.extract_strided_slice %161 {offsets = [0, 0], sizes = [8, 64], strides = [1, 1]} : vector<8x96xf32> to vector<8x64xf32>
    %164 = arith.addf %162, %163 : vector<8x64xf32>
    %165 = arith.negf %164 : vector<8x64xf32>
    %166 = math.exp %165 : vector<8x64xf32>
    %cst_38 = arith.constant 1.000000e+00 : f32
    %167 = vector.broadcast %cst_38 : f32 to vector<8x64xf32>
    %168 = arith.addf %167, %166 : vector<8x64xf32>
    %169 = arith.divf %167, %168 : vector<8x64xf32>
    %170 = vector.extract_strided_slice %169 {offsets = [0, 0], sizes = [8, 32], strides = [1, 1]} : vector<8x64xf32> to vector<8x32xf32>
    %171 = vector.extract_strided_slice %169 {offsets = [0, 32], sizes = [8, 32], strides = [1, 1]} : vector<8x64xf32> to vector<8x32xf32>
    %172 = vector.extract_strided_slice %158 {offsets = [0, 64], sizes = [8, 32], strides = [1, 1]} : vector<8x96xf32> to vector<8x32xf32>
    %173 = vector.extract_strided_slice %161 {offsets = [0, 64], sizes = [8, 32], strides = [1, 1]} : vector<8x96xf32> to vector<8x32xf32>
    %174 = arith.mulf %170, %173 : vector<8x32xf32>
    %175 = arith.addf %172, %174 : vector<8x32xf32>
    %176 = math.tanh %175 : vector<8x32xf32>
    %cst_39 = arith.constant 1.000000e+00 : f32
    %177 = vector.broadcast %cst_39 : f32 to vector<8x32xf32>
    %178 = arith.subf %177, %171 : vector<8x32xf32>
    %179 = arith.mulf %178, %176 : vector<8x32xf32>
    %180 = arith.mulf %171, %150 : vector<8x32xf32>
    %181 = arith.addf %179, %180 : vector<8x32xf32>
    %182 = vector.extract_strided_slice %12 {offsets = [4, 0, 0], sizes = [1, 8, 1], strides = [1, 1, 1]} : vector<8x8x1xi1> to vector<1x8x1xi1>
    %183 = vector.shape_cast %182 : vector<1x8x1xi1> to vector<8x1xi1>
    %184 = vector.shape_cast %183 : vector<8x1xi1> to vector<8x1xi1>
    %185 = vector.broadcast %184 : vector<8x1xi1> to vector<8x32xi1>
    %186 = arith.select %185, %181, %150 : vector<8x32xi1>, vector<8x32xf32>
    %cst_40 = arith.constant 0.000000e+00 : f32
    %187 = vector.shape_cast %183 : vector<8x1xi1> to vector<8x1xi1>
    %188 = vector.broadcast %187 : vector<8x1xi1> to vector<8x32xi1>
    %189 = vector.broadcast %cst_40 : f32 to vector<8x32xf32>
    %190 = arith.select %188, %181, %189 : vector<8x32xi1>, vector<8x32xf32>
    %c4 = arith.constant 4 : index
    %c0_41 = arith.constant 0 : index
    %c0_42 = arith.constant 0 : index
    %191 = vector.load %arg6[%c4, %c0_41, %c0_42] : memref<8x8x32xf32, #tpu.memory_space<vmem>>, vector<1x8x32xf32>
    %192 = vector.shape_cast %191 : vector<1x8x32xf32> to vector<8x32xf32>
    %193 = vector.shape_cast %190 : vector<8x32xf32> to vector<1x8x32xf32>
    tpu.vector_store %arg6[%c4, %c0_41, %c0_42], %193 {strides = array<i32>} : memref<8x8x32xf32, #tpu.memory_space<vmem>>, vector<1x8x32xf32>,
    %194 = vector.extract_strided_slice %5 {offsets = [40, 0], sizes = [8, 96], strides = [1, 1]} : vector<64x96xf32> to vector<8x96xf32>
    %cst_43 = arith.constant dense<0.000000e+00> : vector<8x96xf32>
    %195 = tpu.matmul %186, %6, %cst_43 {dimension_numbers = #tpu.dot_dimension_numbers<[1], [0], [0], [1], [0, 0, 1, 1], [], []>} : vector<8x32xf32>, vector<32x96xf32>, vector<8x96xf32> -> vector<8x96xf32>
    %196 = vector.broadcast %7 : vector<1x96xf32> to vector<8x96xf32>
    %197 = arith.addf %195, %196 : vector<8x96xf32>
    %198 = vector.extract_strided_slice %194 {offsets = [0, 0], sizes = [8, 64], strides = [1, 1]} : vector<8x96xf32> to vector<8x64xf32>
    %199 = vector.extract_strided_slice %197 {offsets = [0, 0], sizes = [8, 64], strides = [1, 1]} : vector<8x96xf32> to vector<8x64xf32>
    %200 = arith.addf %198, %199 : vector<8x64xf32>
    %201 = arith.negf %200 : vector<8x64xf32>
    %202 = math.exp %201 : vector<8x64xf32>
    %cst_44 = arith.constant 1.000000e+00 : f32
    %203 = vector.broadcast %cst_44 : f32 to vector<8x64xf32>
    %204 = arith.addf %203, %202 : vector<8x64xf32>
    %205 = arith.divf %203, %204 : vector<8x64xf32>
    %206 = vector.extract_strided_slice %205 {offsets = [0, 0], sizes = [8, 32], strides = [1, 1]} : vector<8x64xf32> to vector<8x32xf32>
    %207 = vector.extract_strided_slice %205 {offsets = [0, 32], sizes = [8, 32], strides = [1, 1]} : vector<8x64xf32> to vector<8x32xf32>
    %208 = vector.extract_strided_slice %194 {offsets = [0, 64], sizes = [8, 32], strides = [1, 1]} : vector<8x96xf32> to vector<8x32xf32>
    %209 = vector.extract_strided_slice %197 {offsets = [0, 64], sizes = [8, 32], strides = [1, 1]} : vector<8x96xf32> to vector<8x32xf32>
    %210 = arith.mulf %206, %209 : vector<8x32xf32>
    %211 = arith.addf %208, %210 : vector<8x32xf32>
    %212 = math.tanh %211 : vector<8x32xf32>
    %cst_45 = arith.constant 1.000000e+00 : f32
    %213 = vector.broadcast %cst_45 : f32 to vector<8x32xf32>
    %214 = arith.subf %213, %207 : vector<8x32xf32>
    %215 = arith.mulf %214, %212 : vector<8x32xf32>
    %216 = arith.mulf %207, %186 : vector<8x32xf32>
    %217 = arith.addf %215, %216 : vector<8x32xf32>
    %218 = vector.extract_strided_slice %12 {offsets = [5, 0, 0], sizes = [1, 8, 1], strides = [1, 1, 1]} : vector<8x8x1xi1> to vector<1x8x1xi1>
    %219 = vector.shape_cast %218 : vector<1x8x1xi1> to vector<8x1xi1>
    %220 = vector.shape_cast %219 : vector<8x1xi1> to vector<8x1xi1>
    %221 = vector.broadcast %220 : vector<8x1xi1> to vector<8x32xi1>
    %222 = arith.select %221, %217, %186 : vector<8x32xi1>, vector<8x32xf32>
    %cst_46 = arith.constant 0.000000e+00 : f32
    %223 = vector.shape_cast %219 : vector<8x1xi1> to vector<8x1xi1>
    %224 = vector.broadcast %223 : vector<8x1xi1> to vector<8x32xi1>
    %225 = vector.broadcast %cst_46 : f32 to vector<8x32xf32>
    %226 = arith.select %224, %217, %225 : vector<8x32xi1>, vector<8x32xf32>
    %c5 = arith.constant 5 : index
    %c0_47 = arith.constant 0 : index
    %c0_48 = arith.constant 0 : index
    %227 = vector.load %arg6[%c5, %c0_47, %c0_48] : memref<8x8x32xf32, #tpu.memory_space<vmem>>, vector<1x8x32xf32>
    %228 = vector.shape_cast %227 : vector<1x8x32xf32> to vector<8x32xf32>
    %229 = vector.shape_cast %226 : vector<8x32xf32> to vector<1x8x32xf32>
    tpu.vector_store %arg6[%c5, %c0_47, %c0_48], %229 {strides = array<i32>} : memref<8x8x32xf32, #tpu.memory_space<vmem>>, vector<1x8x32xf32>,
    %230 = vector.extract_strided_slice %5 {offsets = [48, 0], sizes = [8, 96], strides = [1, 1]} : vector<64x96xf32> to vector<8x96xf32>
    %cst_49 = arith.constant dense<0.000000e+00> : vector<8x96xf32>
    %231 = tpu.matmul %222, %6, %cst_49 {dimension_numbers = #tpu.dot_dimension_numbers<[1], [0], [0], [1], [0, 0, 1, 1], [], []>} : vector<8x32xf32>, vector<32x96xf32>, vector<8x96xf32> -> vector<8x96xf32>
    %232 = vector.broadcast %7 : vector<1x96xf32> to vector<8x96xf32>
    %233 = arith.addf %231, %232 : vector<8x96xf32>
    %234 = vector.extract_strided_slice %230 {offsets = [0, 0], sizes = [8, 64], strides = [1, 1]} : vector<8x96xf32> to vector<8x64xf32>
    %235 = vector.extract_strided_slice %233 {offsets = [0, 0], sizes = [8, 64], strides = [1, 1]} : vector<8x96xf32> to vector<8x64xf32>
    %236 = arith.addf %234, %235 : vector<8x64xf32>
    %237 = arith.negf %236 : vector<8x64xf32>
    %238 = math.exp %237 : vector<8x64xf32>
    %cst_50 = arith.constant 1.000000e+00 : f32
    %239 = vector.broadcast %cst_50 : f32 to vector<8x64xf32>
    %240 = arith.addf %239, %238 : vector<8x64xf32>
    %241 = arith.divf %239, %240 : vector<8x64xf32>
    %242 = vector.extract_strided_slice %241 {offsets = [0, 0], sizes = [8, 32], strides = [1, 1]} : vector<8x64xf32> to vector<8x32xf32>
    %243 = vector.extract_strided_slice %241 {offsets = [0, 32], sizes = [8, 32], strides = [1, 1]} : vector<8x64xf32> to vector<8x32xf32>
    %244 = vector.extract_strided_slice %230 {offsets = [0, 64], sizes = [8, 32], strides = [1, 1]} : vector<8x96xf32> to vector<8x32xf32>
    %245 = vector.extract_strided_slice %233 {offsets = [0, 64], sizes = [8, 32], strides = [1, 1]} : vector<8x96xf32> to vector<8x32xf32>
    %246 = arith.mulf %242, %245 : vector<8x32xf32>
    %247 = arith.addf %244, %246 : vector<8x32xf32>
    %248 = math.tanh %247 : vector<8x32xf32>
    %cst_51 = arith.constant 1.000000e+00 : f32
    %249 = vector.broadcast %cst_51 : f32 to vector<8x32xf32>
    %250 = arith.subf %249, %243 : vector<8x32xf32>
    %251 = arith.mulf %250, %248 : vector<8x32xf32>
    %252 = arith.mulf %243, %222 : vector<8x32xf32>
    %253 = arith.addf %251, %252 : vector<8x32xf32>
    %254 = vector.extract_strided_slice %12 {offsets = [6, 0, 0], sizes = [1, 8, 1], strides = [1, 1, 1]} : vector<8x8x1xi1> to vector<1x8x1xi1>
    %255 = vector.shape_cast %254 : vector<1x8x1xi1> to vector<8x1xi1>
    %256 = vector.shape_cast %255 : vector<8x1xi1> to vector<8x1xi1>
    %257 = vector.broadcast %256 : vector<8x1xi1> to vector<8x32xi1>
    %258 = arith.select %257, %253, %222 : vector<8x32xi1>, vector<8x32xf32>
    %cst_52 = arith.constant 0.000000e+00 : f32
    %259 = vector.shape_cast %255 : vector<8x1xi1> to vector<8x1xi1>
    %260 = vector.broadcast %259 : vector<8x1xi1> to vector<8x32xi1>
    %261 = vector.broadcast %cst_52 : f32 to vector<8x32xf32>
    %262 = arith.select %260, %253, %261 : vector<8x32xi1>, vector<8x32xf32>
    %c6 = arith.constant 6 : index
    %c0_53 = arith.constant 0 : index
    %c0_54 = arith.constant 0 : index
    %263 = vector.load %arg6[%c6, %c0_53, %c0_54] : memref<8x8x32xf32, #tpu.memory_space<vmem>>, vector<1x8x32xf32>
    %264 = vector.shape_cast %263 : vector<1x8x32xf32> to vector<8x32xf32>
    %265 = vector.shape_cast %262 : vector<8x32xf32> to vector<1x8x32xf32>
    tpu.vector_store %arg6[%c6, %c0_53, %c0_54], %265 {strides = array<i32>} : memref<8x8x32xf32, #tpu.memory_space<vmem>>, vector<1x8x32xf32>,
    %266 = vector.extract_strided_slice %5 {offsets = [56, 0], sizes = [8, 96], strides = [1, 1]} : vector<64x96xf32> to vector<8x96xf32>
    %cst_55 = arith.constant dense<0.000000e+00> : vector<8x96xf32>
    %267 = tpu.matmul %258, %6, %cst_55 {dimension_numbers = #tpu.dot_dimension_numbers<[1], [0], [0], [1], [0, 0, 1, 1], [], []>} : vector<8x32xf32>, vector<32x96xf32>, vector<8x96xf32> -> vector<8x96xf32>
    %268 = vector.broadcast %7 : vector<1x96xf32> to vector<8x96xf32>
    %269 = arith.addf %267, %268 : vector<8x96xf32>
    %270 = vector.extract_strided_slice %266 {offsets = [0, 0], sizes = [8, 64], strides = [1, 1]} : vector<8x96xf32> to vector<8x64xf32>
    %271 = vector.extract_strided_slice %269 {offsets = [0, 0], sizes = [8, 64], strides = [1, 1]} : vector<8x96xf32> to vector<8x64xf32>
    %272 = arith.addf %270, %271 : vector<8x64xf32>
    %273 = arith.negf %272 : vector<8x64xf32>
    %274 = math.exp %273 : vector<8x64xf32>
    %cst_56 = arith.constant 1.000000e+00 : f32
    %275 = vector.broadcast %cst_56 : f32 to vector<8x64xf32>
    %276 = arith.addf %275, %274 : vector<8x64xf32>
    %277 = arith.divf %275, %276 : vector<8x64xf32>
    %278 = vector.extract_strided_slice %277 {offsets = [0, 0], sizes = [8, 32], strides = [1, 1]} : vector<8x64xf32> to vector<8x32xf32>
    %279 = vector.extract_strided_slice %277 {offsets = [0, 32], sizes = [8, 32], strides = [1, 1]} : vector<8x64xf32> to vector<8x32xf32>
    %280 = vector.extract_strided_slice %266 {offsets = [0, 64], sizes = [8, 32], strides = [1, 1]} : vector<8x96xf32> to vector<8x32xf32>
    %281 = vector.extract_strided_slice %269 {offsets = [0, 64], sizes = [8, 32], strides = [1, 1]} : vector<8x96xf32> to vector<8x32xf32>
    %282 = arith.mulf %278, %281 : vector<8x32xf32>
    %283 = arith.addf %280, %282 : vector<8x32xf32>
    %284 = math.tanh %283 : vector<8x32xf32>
    %cst_57 = arith.constant 1.000000e+00 : f32
    %285 = vector.broadcast %cst_57 : f32 to vector<8x32xf32>
    %286 = arith.subf %285, %279 : vector<8x32xf32>
    %287 = arith.mulf %286, %284 : vector<8x32xf32>
    %288 = arith.mulf %279, %258 : vector<8x32xf32>
    %289 = arith.addf %287, %288 : vector<8x32xf32>
    %290 = vector.extract_strided_slice %12 {offsets = [7, 0, 0], sizes = [1, 8, 1], strides = [1, 1, 1]} : vector<8x8x1xi1> to vector<1x8x1xi1>
    %291 = vector.shape_cast %290 : vector<1x8x1xi1> to vector<8x1xi1>
    %292 = vector.shape_cast %291 : vector<8x1xi1> to vector<8x1xi1>
    %293 = vector.broadcast %292 : vector<8x1xi1> to vector<8x32xi1>
    %294 = arith.select %293, %289, %258 : vector<8x32xi1>, vector<8x32xf32>
    %cst_58 = arith.constant 0.000000e+00 : f32
    %295 = vector.shape_cast %291 : vector<8x1xi1> to vector<8x1xi1>
    %296 = vector.broadcast %295 : vector<8x1xi1> to vector<8x32xi1>
    %297 = vector.broadcast %cst_58 : f32 to vector<8x32xf32>
    %298 = arith.select %296, %289, %297 : vector<8x32xi1>, vector<8x32xf32>
    %c7 = arith.constant 7 : index
    %c0_59 = arith.constant 0 : index
    %c0_60 = arith.constant 0 : index
    %299 = vector.load %arg6[%c7, %c0_59, %c0_60] : memref<8x8x32xf32, #tpu.memory_space<vmem>>, vector<1x8x32xf32>
    %300 = vector.shape_cast %299 : vector<1x8x32xf32> to vector<8x32xf32>
    %301 = vector.shape_cast %298 : vector<8x32xf32> to vector<1x8x32xf32>
    tpu.vector_store %arg6[%c7, %c0_59, %c0_60], %301 {strides = array<i32>} : memref<8x8x32xf32, #tpu.memory_space<vmem>>, vector<1x8x32xf32>,
    %c0_61 = arith.constant 0 : index
    %c0_62 = arith.constant 0 : index
    %c0_63 = arith.constant 0 : index
    %302 = vector.load %arg7[%c0_61, %c0_62, %c0_63] : memref<1x8x32xf32, #tpu.memory_space<vmem>>, vector<1x8x32xf32>
    %303 = vector.shape_cast %302 : vector<1x8x32xf32> to vector<8x32xf32>
    %304 = vector.shape_cast %294 : vector<8x32xf32> to vector<1x8x32xf32>
    tpu.vector_store %arg7[%c0_61, %c0_62, %c0_63], %304 {strides = array<i32>} : memref<1x8x32xf32, #tpu.memory_space<vmem>>, vector<1x8x32xf32>,
    return
  }
}

</mosaic_0001>

<llo_original>
// kernel: normal_encoder_forward.1
$region0: #{normal_encoder_forward.1}
  #allocation0 [shape = 'u32[]', space=smem, size = 0x4, offset = 0x4, fixed_abs, tag = 'smem constant byte address 0x4 - core index']
  #allocation1 [shape = 'u32[144,128]{1,0:T(1,128)}', space=vmem, size = 0x12000, scoped, tag = 'internal scratch']
  %s0 = inlined_call_operand.vmem [shape: f32[64,32], index: 0, kind: input, shape index: {}]
  %s1 = inlined_call_operand.vmem [shape: s32[8,1], index: 1, kind: input, shape index: {}]
  %s2 = inlined_call_operand.vmem [shape: f32[32,96], index: 2, kind: input, shape index: {}]
  %s3 = inlined_call_operand.vmem [shape: f32[32,96], index: 3, kind: input, shape index: {}]
  %s4 = inlined_call_operand.vmem [shape: f32[1,96], index: 4, kind: input, shape index: {}]
  %s5 = inlined_call_operand.vmem [shape: f32[1,96], index: 5, kind: input, shape index: {}]
  %s6 = inlined_call_operand.hbm [shape: f32[8,8,32], index: 6, kind: output, shape index: {0}]
  %s7 = inlined_call_operand.hbm [shape: f32[1,8,32], index: 7, kind: output, shape index: {1}]
  %8 = xla_tuple %s6, %s7
  %s9 = sld [smem:[#allocation0]]
  $region42: #{normal_encoder_forward.1} parent=0
    _
  %s11 = ssub.s32 1, %s9
  %s12 = scalar_select 0, %s11, %s9
  $region1: #{normal_encoder_forward.1} parent=0
    #allocation2 [shape = 'u8[32768]{0}', space=vmem, size = 0x8000, scoped, tag = 'output window, operand 0, single buffered']
    #allocation3 [shape = 's32[1]{0}', space=sflag, size = 0x4, scoped, tag = 'scoped memory for normal_encoder_forward.1']
    #allocation4 [shape = 'u8[4096]{0}', space=vmem, size = 0x1000, scoped, tag = 'output window, operand 1, single buffered']
    #allocation5 [shape = 's32[1]{0}', space=sflag, size = 0x4, scoped, tag = 'scoped memory for normal_encoder_forward.1']
    %13 = vsyncpa [#allocation3], 0
    %14 = vsyncpa [#allocation5], 0
    // Predicated region
    $region2: #{normal_encoder_forward.1} parent=1 // pred_check
      _
    $region3: #{normal_encoder_forward.1} parent=1 // pred_check_branch
      %16 = sbr.rel (0) target = $region5
    $region4: #{normal_encoder_forward.1} parent=1 // pred_region
      _
    $region5: #{normal_encoder_forward.1} parent=1 // pred_fallthru
      _
    // Predicated region
    $region6: #{normal_encoder_forward.1} parent=1 // pred_check
      _
    $region7: #{normal_encoder_forward.1} parent=1 // pred_check_branch
      %18 = sbr.rel (0) target = $region9
    $region8: #{normal_encoder_forward.1} parent=1 // pred_region
      _
    $region9: #{normal_encoder_forward.1} parent=1 // pred_fallthru
      _
    // Predicated region
    $region10: #{normal_encoder_forward.1} parent=1 // pred_check
      _
    $region11: #{normal_encoder_forward.1} parent=1 // pred_check_branch
      %20 = sbr.rel (0) target = $region13
    $region12: #{normal_encoder_forward.1} parent=1 // pred_region
      _
    $region13: #{normal_encoder_forward.1} parent=1 // pred_fallthru
      _
    // Predicated region
    $region14: #{normal_encoder_forward.1} parent=1 // pred_check
      _
    $region15: #{normal_encoder_forward.1} parent=1 // pred_check_branch
      %22 = sbr.rel (0) target = $region17
    $region16: #{normal_encoder_forward.1} parent=1 // pred_region
      _
    $region17: #{normal_encoder_forward.1} parent=1 // pred_fallthru
      _
    // Predicated region
    $region18: #{normal_encoder_forward.1} parent=1 // pred_check
      _
    $region19: #{normal_encoder_forward.1} parent=1 // pred_check_branch
      %24 = sbr.rel (0) target = $region21
    $region20: #{normal_encoder_forward.1} parent=1 // pred_region
      _
    $region21: #{normal_encoder_forward.1} parent=1 // pred_fallthru
      _
    // Predicated region
    $region22: #{normal_encoder_forward.1} parent=1 // pred_check
      _
    $region23: #{normal_encoder_forward.1} parent=1 // pred_check_branch
      %26 = sbr.rel (0) target = $region25
    $region24: #{normal_encoder_forward.1} parent=1 // pred_region
      _
    $region25: #{normal_encoder_forward.1} parent=1 // pred_fallthru
      _
    %v27 = vld [vmem:[%s0] sm:$0xff]
    %v28 = vld [vmem:[%s0 + $0x8] sm:$0xff]
    %v29 = vld [vmem:[%s0 + $0x10] sm:$0xff]
    %v30 = vld [vmem:[%s0 + $0x18] sm:$0xff]
    %v31 = vld [vmem:[%s0 + $0x20] sm:$0xff]
    %v32 = vld [vmem:[%s0 + $0x28] sm:$0xff]
    %v33 = vld [vmem:[%s0 + $0x30] sm:$0xff]
    %v34 = vld [vmem:[%s0 + $0x38] sm:$0xff]
    %v35 = vld [vmem:[%s2] sm:$0xff]
    %v36 = vld [vmem:[%s2 + $0x8] sm:$0xff]
    %v37 = vld [vmem:[%s2 + $0x10] sm:$0xff]
    %v38 = vld [vmem:[%s2 + $0x18] sm:$0xff]
    %v39 = vld [vmem:[%s4] sm:$0x1]
    %v41 = vlaneseq
    %v42 = vshrl.u32 %v41, 7
    %v43 = vsub.s32 0, %v42
    %v44 = vrot.slane %v39, %v43
    %vm46 = vcmask 261120
    %v48 = vsel %vm46, %v27, 0
    %v51 = vsel %vm46, %v28, 0
    %v54 = vsel %vm46, %v29, 0
    %v57 = vsel %vm46, %v30, 0
    %v60 = vsel %vm46, %v31, 0
    %v63 = vsel %vm46, %v32, 0
    %v66 = vsel %vm46, %v33, 0
    %v69 = vsel %vm46, %v34, 0
    %71 = vmatprep.subr.mxu0 0.0
    %72 = vmatpush1.msra.mxu0 %v35
    %73 = vmatprep.subr.mxu0 0.0
    %74 = vmatpush1.msra.mxu0 %v36
    %75 = vmatprep.subr.mxu0 0.0
    %76 = vmatpush1.msra.mxu0 %v37
    %77 = vmatprep.subr.mxu0 0.0
    %78 = vmatpush1.msra.mxu0 %v38
    %79 = vmatprep.subr.mxu0 0.0
    %80 = vmatpush1.msra.mxu0 0.0
    %81 = vmatprep.subr.mxu0 0.0
    %82 = vmatpush1.msra.mxu0 0.0
    %83 = vmatprep.subr.mxu0 0.0
    %84 = vmatpush1.msra.mxu0 0.0
    %85 = vmatprep.subr.mxu0 0.0
    %86 = vmatpush1.msra.mxu0 0.0
    %87 = vmatprep.subr.mxu0 0.0
    %88 = vmatpush1.msra.mxu0 0.0
    %89 = vmatprep.subr.mxu0 0.0
    %90 = vmatpush1.msra.mxu0 0.0
    %91 = vmatprep.subr.mxu0 0.0
    %92 = vmatpush1.msra.mxu0 0.0
    %93 = vmatprep.subr.mxu0 0.0
    %94 = vmatpush1.msra.mxu0 0.0
    %95 = vmatprep.subr.mxu0 0.0
    %96 = vmatpush1.msra.mxu0 0.0
    %97 = vmatprep.subr.mxu0 0.0
    %98 = vmatpush1.msra.mxu0 0.0
    %99 = vmatprep.subr.mxu0 0.0
    %100 = vmatpush1.msra.mxu0 0.0
    %101 = vmatprep.subr.mxu0 0.0
    %102 = vmatpush1.msra.mxu0 0.0
    %103 = vmatprep.subr.mxu0 0.0
    %104 = vmatpush1.msra.mxu0 0.0
    %105 = vmatprep.subr.mxu0 0.0
    %106 = vmatpush1.msra.mxu0 0.0
    %107 = vmatprep.subr.mxu0 0.0
    %108 = vmatpush1.msra.mxu0 0.0
    %109 = vmatprep.subr.mxu0 0.0
    %110 = vmatpush1.msra.mxu0 0.0
    %111 = vmatprep.subr.mxu0 0.0
    %112 = vmatpush1.msra.mxu0 0.0
    %113 = vmatprep.subr.mxu0 0.0
    %114 = vmatpush1.msra.mxu0 0.0
    %115 = vmatprep.subr.mxu0 0.0
    %116 = vmatpush1.msra.mxu0 0.0
    %117 = vmatprep.subr.mxu0 0.0
    %118 = vmatpush1.msra.mxu0 0.0
    %119 = vmatprep.subr.mxu0 0.0
    %120 = vmatpush1.msra.mxu0 0.0
    %121 = vmatprep.subr.mxu0 0.0
    %122 = vmatpush1.msra.mxu0 0.0
    %123 = vmatprep.subr.mxu0 0.0
    %124 = vmatpush1.msra.mxu0 0.0
    %125 = vmatprep.subr.mxu0 0.0
    %126 = vmatpush1.msra.mxu0 0.0
    %127 = vmatprep.subr.mxu0 0.0
    %128 = vmatpush1.msra.mxu0 0.0
    %129 = vmatprep.subr.mxu0 0.0
    %130 = vmatpush1.msra.mxu0 0.0
    %131 = vmatprep.subr.mxu0 0.0
    %132 = vmatpush1.msra.mxu0 0.0
    %133 = vmatprep.subr.mxu0 0.0
    %134 = vmatpush1.msra.mxu0 0.0
    %135 = vmatprep.mubr.f32.mxu0 0.0
    %136 = vmatmul.mubr.f32.gmra.mrb[0].mxu0 %v48
    %v137 = vpop.f32.mrb[0].mxu0
    %v138 = vadd.f32 %v44, %v137
    %v139 = vpop.f32.mrb[0].mxu0
    %140 = vmatprep.mubr.f32.mxu0 0.0
    %141 = vmatmul.mubr.f32.gmra.mrb[0].mxu0 %v51
    %v142 = vpop.f32.mrb[0].mxu0
    %v143 = vadd.f32 %v44, %v142
    %v144 = vpop.f32.mrb[0].mxu0
    %145 = vmatprep.mubr.f32.mxu0 0.0
    %146 = vmatmul.mubr.f32.gmra.mrb[0].mxu0 %v54
    %v147 = vpop.f32.mrb[0].mxu0
    %v148 = vadd.f32 %v44, %v147
    %v149 = vpop.f32.mrb[0].mxu0
    %150 = vmatprep.mubr.f32.mxu0 0.0
    %151 = vmatmul.mubr.f32.gmra.mrb[0].mxu0 %v57
    %v152 = vpop.f32.mrb[0].mxu0
    %v153 = vadd.f32 %v44, %v152
    %v154 = vpop.f32.mrb[0].mxu0
    %155 = vmatprep.mubr.f32.mxu0 0.0
    %156 = vmatmul.mubr.f32.gmra.mrb[0].mxu0 %v60
    %v157 = vpop.f32.mrb[0].mxu0
    %v158 = vadd.f32 %v44, %v157
    %v159 = vpop.f32.mrb[0].mxu0
    %160 = vmatprep.mubr.f32.mxu0 0.0
    %161 = vmatmul.mubr.f32.gmra.mrb[0].mxu0 %v63
    %v162 = vpop.f32.mrb[0].mxu0
    %v163 = vadd.f32 %v44, %v162
    %v164 = vpop.f32.mrb[0].mxu0
    %165 = vmatprep.mubr.f32.mxu0 0.0
    %166 = vmatmul.mubr.f32.gmra.mrb[0].mxu0 %v66
    %v167 = vpop.f32.mrb[0].mxu0
    %v168 = vadd.f32 %v44, %v167
    %v169 = vpop.f32.mrb[0].mxu0
    %170 = vmatprep.mubr.f32.mxu0 0.0
    %171 = vmatmul.mubr.f32.gmra.mrb[0].mxu0 %v69
    %v172 = vpop.f32.mrb[0].mxu0
    %v173 = vadd.f32 %v44, %v172
    %v174 = vpop.f32.mrb[0].mxu0
    %175 = vdwg.mxu0
    %v176 = vld [vmem:[%s3] sm:$0xff]
    %v177 = vld [vmem:[%s3 + $0x8] sm:$0xff]
    %v178 = vld [vmem:[%s3 + $0x10] sm:$0xff]
    %v179 = vld [vmem:[%s3 + $0x18] sm:$0xff]
    %v180 = vld [vmem:[%s5] sm:$0x1]
    %v181 = vld [vmem:[%s1] sm:$0xff]
    %vm182 = vcmp.gt.s32.totalorder %v181, 0
    %vm183 = vcmp.gt.s32.totalorder %v181, 1
    %vm184 = vcmp.gt.s32.totalorder %v181, 2
    %vm185 = vcmp.gt.s32.totalorder %v181, 3
    %vm186 = vcmp.gt.s32.totalorder %v181, 4
    %vm187 = vcmp.gt.s32.totalorder %v181, 5
    %vm188 = vcmp.gt.s32.totalorder %v181, 6
    %vm189 = vcmp.gt.s32.totalorder %v181, 7
    %v191 = vlaneseq
    %v192 = vshrl.u32 %v191, 7
    %v193 = vsub.s32 0, %v192
    %v194 = vrot.slane %v180, %v193
    %v197 = vsel %vm46, 0.0, 0
    %199 = vmatprep.subr.mxu0 0.0
    %200 = vmatpush1.msra.mxu0 %v176
    %201 = vmatprep.subr.mxu0 0.0
    %202 = vmatpush1.msra.mxu0 %v177
    %203 = vmatprep.subr.mxu0 0.0
    %204 = vmatpush1.msra.mxu0 %v178
    %205 = vmatprep.subr.mxu0 0.0
    %206 = vmatpush1.msra.mxu0 %v179
    %207 = vmatprep.subr.mxu0 0.0
    %208 = vmatpush1.msra.mxu0 0.0
    %209 = vmatprep.subr.mxu0 0.0
    %210 = vmatpush1.msra.mxu0 0.0
    %211 = vmatprep.subr.mxu0 0.0
    %212 = vmatpush1.msra.mxu0 0.0
    %213 = vmatprep.subr.mxu0 0.0
    %214 = vmatpush1.msra.mxu0 0.0
    %215 = vmatprep.subr.mxu0 0.0
    %216 = vmatpush1.msra.mxu0 0.0
    %217 = vmatprep.subr.mxu0 0.0
    %218 = vmatpush1.msra.mxu0 0.0
    %219 = vmatprep.subr.mxu0 0.0
    %220 = vmatpush1.msra.mxu0 0.0
    %221 = vmatprep.subr.mxu0 0.0
    %222 = vmatpush1.msra.mxu0 0.0
    %223 = vmatprep.subr.mxu0 0.0
    %224 = vmatpush1.msra.mxu0 0.0
    %225 = vmatprep.subr.mxu0 0.0
    %226 = vmatpush1.msra.mxu0 0.0
    %227 = vmatprep.subr.mxu0 0.0
    %228 = vmatpush1.msra.mxu0 0.0
    %229 = vmatprep.subr.mxu0 0.0
    %230 = vmatpush1.msra.mxu0 0.0
    %231 = vmatprep.subr.mxu0 0.0
    %232 = vmatpush1.msra.mxu0 0.0
    %233 = vmatprep.subr.mxu0 0.0
    %234 = vmatpush1.msra.mxu0 0.0
    %235 = vmatprep.subr.mxu0 0.0
    %236 = vmatpush1.msra.mxu0 0.0
    %237 = vmatprep.subr.mxu0 0.0
    %238 = vmatpush1.msra.mxu0 0.0
    %239 = vmatprep.subr.mxu0 0.0
    %240 = vmatpush1.msra.mxu0 0.0
    %241 = vmatprep.subr.mxu0 0.0
    %242 = vmatpush1.msra.mxu0 0.0
    %243 = vmatprep.subr.mxu0 0.0
    %244 = vmatpush1.msra.mxu0 0.0
    %245 = vmatprep.subr.mxu0 0.0
    %246 = vmatpush1.msra.mxu0 0.0
    %247 = vmatprep.subr.mxu0 0.0
    %248 = vmatpush1.msra.mxu0 0.0
    %249 = vmatprep.subr.mxu0 0.0
    %250 = vmatpush1.msra.mxu0 0.0
    %251 = vmatprep.subr.mxu0 0.0
    %252 = vmatpush1.msra.mxu0 0.0
    %253 = vmatprep.subr.mxu0 0.0
    %254 = vmatpush1.msra.mxu0 0.0
    %255 = vmatprep.subr.mxu0 0.0
    %256 = vmatpush1.msra.mxu0 0.0
    %257 = vmatprep.subr.mxu0 0.0
    %258 = vmatpush1.msra.mxu0 0.0
    %259 = vmatprep.subr.mxu0 0.0
    %260 = vmatpush1.msra.mxu0 0.0
    %261 = vmatprep.subr.mxu0 0.0
    %262 = vmatpush1.msra.mxu0 0.0
    %263 = vmatprep.mubr.f32.mxu0 0.0
    %264 = vmatmul.mubr.f32.gmra.mrb[0].mxu0 %v197
    %v265 = vpop.f32.mrb[0].mxu0
    %v266 = vadd.f32 %v194, %v265
    %v267 = vpop.f32.mrb[0].mxu0
    %268 = vdwg.mxu0
    %v269 = vadd.f32 %v138, %v266
    %v270 = vxor.u32 %v269, 2147483648
    %v271 = vmul.f32 %v270, 1.442695
    %v272 = vpow.pop %v271
    %v273 = vadd.f32 %v272, 1.0
    %v274 = vrcp.pop %v273
    %v275 = vmul.f32 1.0, %v274
    %277 = vrot.lane.b32.xlu0 %v266, 64
    %v278 = vpop.permute.xlu0 %277
    %v280 = vmul.f32 %v275, %v278
    %282 = vrot.lane.b32.xlu0 %v280, 64
    %v283 = vpop.permute.xlu0 %282
    %v285 = vadd.f32 %v138, %v283
    %v286 = vtanh.pop %v285
    %v287 = vsub.f32 1.0, %v275
    %289 = vrot.lane.b32.xlu0 %v286, 96
    %v290 = vpop.permute.xlu0 %289
    %v292 = vmul.f32 %v287, %v290
    %v293 = vmul.f32 %v275, 0.0
    %v294 = vadd.f32 %v292, %v293
    %v295 = vsel %vm182, 1, 0
    %296 = vset.pattern.permute.xlu0 0
    %297 = vperm.xlu0 %296, %v295
    %v298 = vpop.permute.xlu0 %297
    %vm299 = vcmp.eq.s32.totalorder %v298, 1
    %v300 = vsel %vm299, %v294, 0.0
    %302 = vrot.lane.b32.xlu0 %v300, 96
    %v303 = vpop.permute.xlu0 %302
    %305 = vst.msk [vmem:[#allocation2] sm:$0xff] %vm46, %v303
    %v306 = vsel %vm46, %v303, 0
    %308 = vmatprep.subr.mxu0 0.0
    %309 = vmatpush1.msra.mxu0 %v176
    %310 = vmatprep.subr.mxu0 0.0
    %311 = vmatpush1.msra.mxu0 %v177
    %312 = vmatprep.subr.mxu0 0.0
    %313 = vmatpush1.msra.mxu0 %v178
    %314 = vmatprep.subr.mxu0 0.0
    %315 = vmatpush1.msra.mxu0 %v179
    %316 = vmatprep.subr.mxu0 0.0
    %317 = vmatpush1.msra.mxu0 0.0
    %318 = vmatprep.subr.mxu0 0.0
    %319 = vmatpush1.msra.mxu0 0.0
    %320 = vmatprep.subr.mxu0 0.0
    %321 = vmatpush1.msra.mxu0 0.0
    %322 = vmatprep.subr.mxu0 0.0
    %323 = vmatpush1.msra.mxu0 0.0
    %324 = vmatprep.subr.mxu0 0.0
    %325 = vmatpush1.msra.mxu0 0.0
    %326 = vmatprep.subr.mxu0 0.0
    %327 = vmatpush1.msra.mxu0 0.0
    %328 = vmatprep.subr.mxu0 0.0
    %329 = vmatpush1.msra.mxu0 0.0
    %330 = vmatprep.subr.mxu0 0.0
    %331 = vmatpush1.msra.mxu0 0.0
    %332 = vmatprep.subr.mxu0 0.0
    %333 = vmatpush1.msra.mxu0 0.0
    %334 = vmatprep.subr.mxu0 0.0
    %335 = vmatpush1.msra.mxu0 0.0
    %336 = vmatprep.subr.mxu0 0.0
    %337 = vmatpush1.msra.mxu0 0.0
    %338 = vmatprep.subr.mxu0 0.0
    %339 = vmatpush1.msra.mxu0 0.0
    %340 = vmatprep.subr.mxu0 0.0
    %341 = vmatpush1.msra.mxu0 0.0
    %342 = vmatprep.subr.mxu0 0.0
    %343 = vmatpush1.msra.mxu0 0.0
    %344 = vmatprep.subr.mxu0 0.0
    %345 = vmatpush1.msra.mxu0 0.0
    %346 = vmatprep.subr.mxu0 0.0
    %347 = vmatpush1.msra.mxu0 0.0
    %348 = vmatprep.subr.mxu0 0.0
    %349 = vmatpush1.msra.mxu0 0.0
    %350 = vmatprep.subr.mxu0 0.0
    %351 = vmatpush1.msra.mxu0 0.0
    %352 = vmatprep.subr.mxu0 0.0
    %353 = vmatpush1.msra.mxu0 0.0
    %354 = vmatprep.subr.mxu0 0.0
    %355 = vmatpush1.msra.mxu0 0.0
    %356 = vmatprep.subr.mxu0 0.0
    %357 = vmatpush1.msra.mxu0 0.0
    %358 = vmatprep.subr.mxu0 0.0
    %359 = vmatpush1.msra.mxu0 0.0
    %360 = vmatprep.subr.mxu0 0.0
    %361 = vmatpush1.msra.mxu0 0.0
    %362 = vmatprep.subr.mxu0 0.0
    %363 = vmatpush1.msra.mxu0 0.0
    %364 = vmatprep.subr.mxu0 0.0
    %365 = vmatpush1.msra.mxu0 0.0
    %366 = vmatprep.subr.mxu0 0.0
    %367 = vmatpush1.msra.mxu0 0.0
    %368 = vmatprep.subr.mxu0 0.0
    %369 = vmatpush1.msra.mxu0 0.0
    %370 = vmatprep.subr.mxu0 0.0
    %371 = vmatpush1.msra.mxu0 0.0
    %372 = vmatprep.mubr.f32.mxu0 0.0
    %373 = vmatmul.mubr.f32.gmra.mrb[0].mxu0 %v306
    %v374 = vpop.f32.mrb[0].mxu0
    %v375 = vadd.f32 %v194, %v374
    %v376 = vpop.f32.mrb[0].mxu0
    %377 = vdwg.mxu0
    %v378 = vadd.f32 %v143, %v375
    %v379 = vxor.u32 %v378, 2147483648
    %v380 = vmul.f32 %v379, 1.442695
    %v381 = vpow.pop %v380
    %v382 = vadd.f32 %v381, 1.0
    %v383 = vrcp.pop %v382
    %v384 = vmul.f32 1.0, %v383
    %386 = vrot.lane.b32.xlu0 %v375, 64
    %v387 = vpop.permute.xlu0 %386
    %v389 = vmul.f32 %v384, %v387
    %391 = vrot.lane.b32.xlu0 %v389, 64
    %v392 = vpop.permute.xlu0 %391
    %v394 = vadd.f32 %v143, %v392
    %v395 = vtanh.pop %v394
    %v396 = vsub.f32 1.0, %v384
    %398 = vrot.lane.b32.xlu0 %v395, 96
    %v399 = vpop.permute.xlu0 %398
    %v401 = vmul.f32 %v396, %v399
    %v402 = vmul.f32 %v384, %v300
    %v403 = vadd.f32 %v401, %v402
    %v404 = vsel %vm183, 1, 0
    %405 = vset.pattern.permute.xlu0 0
    %406 = vperm.xlu0 %405, %v404
    %v407 = vpop.permute.xlu0 %406
    %vm408 = vcmp.eq.s32.totalorder %v407, 1
    %v409 = vsel %vm408, %v403, %v300
    %v410 = vsel %vm408, %v403, 0.0
    %412 = vrot.lane.b32.xlu0 %v410, 96
    %v413 = vpop.permute.xlu0 %412
    %s415 = scalar_lea.vmem [#allocation2], 8
    %416 = vst.msk [vmem:[%s415] sm:$0xff] %vm46, %v413
    %418 = vrot.lane.b32.xlu0 %v409, 96
    %v419 = vpop.permute.xlu0 %418
    %v420 = vsel %vm46, %v419, 0
    %422 = vmatprep.subr.mxu0 0.0
    %423 = vmatpush1.msra.mxu0 %v176
    %424 = vmatprep.subr.mxu0 0.0
    %425 = vmatpush1.msra.mxu0 %v177
    %426 = vmatprep.subr.mxu0 0.0
    %427 = vmatpush1.msra.mxu0 %v178
    %428 = vmatprep.subr.mxu0 0.0
    %429 = vmatpush1.msra.mxu0 %v179
    %430 = vmatprep.subr.mxu0 0.0
    %431 = vmatpush1.msra.mxu0 0.0
    %432 = vmatprep.subr.mxu0 0.0
    %433 = vmatpush1.msra.mxu0 0.0
    %434 = vmatprep.subr.mxu0 0.0
    %435 = vmatpush1.msra.mxu0 0.0
    %436 = vmatprep.subr.mxu0 0.0
    %437 = vmatpush1.msra.mxu0 0.0
    %438 = vmatprep.subr.mxu0 0.0
    %439 = vmatpush1.msra.mxu0 0.0
    %440 = vmatprep.subr.mxu0 0.0
    %441 = vmatpush1.msra.mxu0 0.0
    %442 = vmatprep.subr.mxu0 0.0
    %443 = vmatpush1.msra.mxu0 0.0
    %444 = vmatprep.subr.mxu0 0.0
    %445 = vmatpush1.msra.mxu0 0.0
    %446 = vmatprep.subr.mxu0 0.0
    %447 = vmatpush1.msra.mxu0 0.0
    %448 = vmatprep.subr.mxu0 0.0
    %449 = vmatpush1.msra.mxu0 0.0
    %450 = vmatprep.subr.mxu0 0.0
    %451 = vmatpush1.msra.mxu0 0.0
    %452 = vmatprep.subr.mxu0 0.0
    %453 = vmatpush1.msra.mxu0 0.0
    %454 = vmatprep.subr.mxu0 0.0
    %455 = vmatpush1.msra.mxu0 0.0
    %456 = vmatprep.subr.mxu0 0.0
    %457 = vmatpush1.msra.mxu0 0.0
    %458 = vmatprep.subr.mxu0 0.0
    %459 = vmatpush1.msra.mxu0 0.0
    %460 = vmatprep.subr.mxu0 0.0
    %461 = vmatpush1.msra.mxu0 0.0
    %462 = vmatprep.subr.mxu0 0.0
    %463 = vmatpush1.msra.mxu0 0.0
    %464 = vmatprep.subr.mxu0 0.0
    %465 = vmatpush1.msra.mxu0 0.0
    %466 = vmatprep.subr.mxu0 0.0
    %467 = vmatpush1.msra.mxu0 0.0
    %468 = vmatprep.subr.mxu0 0.0
    %469 = vmatpush1.msra.mxu0 0.0
    %470 = vmatprep.subr.mxu0 0.0
    %471 = vmatpush1.msra.mxu0 0.0
    %472 = vmatprep.subr.mxu0 0.0
    %473 = vmatpush1.msra.mxu0 0.0
    %474 = vmatprep.subr.mxu0 0.0
    %475 = vmatpush1.msra.mxu0 0.0
    %476 = vmatprep.subr.mxu0 0.0
    %477 = vmatpush1.msra.mxu0 0.0
    %478 = vmatprep.subr.mxu0 0.0
    %479 = vmatpush1.msra.mxu0 0.0
    %480 = vmatprep.subr.mxu0 0.0
    %481 = vmatpush1.msra.mxu0 0.0
    %482 = vmatprep.subr.mxu0 0.0
    %483 = vmatpush1.msra.mxu0 0.0
    %484 = vmatprep.subr.mxu0 0.0
    %485 = vmatpush1.msra.mxu0 0.0
    %486 = vmatprep.mubr.f32.mxu0 0.0
    %487 = vmatmul.mubr.f32.gmra.mrb[0].mxu0 %v420
    %v488 = vpop.f32.mrb[0].mxu0
    %v489 = vadd.f32 %v194, %v488
    %v490 = vpop.f32.mrb[0].mxu0
    %491 = vdwg.mxu0
    %v492 = vadd.f32 %v148, %v489
    %v493 = vxor.u32 %v492, 2147483648
    %v494 = vmul.f32 %v493, 1.442695
    %v495 = vpow.pop %v494
    %v496 = vadd.f32 %v495, 1.0
    %v497 = vrcp.pop %v496
    %v498 = vmul.f32 1.0, %v497
    %500 = vrot.lane.b32.xlu0 %v489, 64
    %v501 = vpop.permute.xlu0 %500
    %v503 = vmul.f32 %v498, %v501
    %505 = vrot.lane.b32.xlu0 %v503, 64
    %v506 = vpop.permute.xlu0 %505
    %v508 = vadd.f32 %v148, %v506
    %v509 = vtanh.pop %v508
    %v510 = vsub.f32 1.0, %v498
    %512 = vrot.lane.b32.xlu0 %v509, 96
    %v513 = vpop.permute.xlu0 %512
    %v515 = vmul.f32 %v510, %v513
    %v516 = vmul.f32 %v498, %v409
    %v517 = vadd.f32 %v515, %v516
    %v518 = vsel %vm184, 1, 0
    %519 = vset.pattern.permute.xlu0 0
    %520 = vperm.xlu0 %519, %v518
    %v521 = vpop.permute.xlu0 %520
    %vm522 = vcmp.eq.s32.totalorder %v521, 1
    %v523 = vsel %vm522, %v517, %v409
    %v524 = vsel %vm522, %v517, 0.0
    %526 = vrot.lane.b32.xlu0 %v524, 96
    %v527 = vpop.permute.xlu0 %526
    %s529 = scalar_lea.vmem [#allocation2], 16
    %530 = vst.msk [vmem:[%s529] sm:$0xff] %vm46, %v527
    %532 = vrot.lane.b32.xlu0 %v523, 96
    %v533 = vpop.permute.xlu0 %532
    %v534 = vsel %vm46, %v533, 0
    %536 = vmatprep.subr.mxu0 0.0
    %537 = vmatpush1.msra.mxu0 %v176
    %538 = vmatprep.subr.mxu0 0.0
    %539 = vmatpush1.msra.mxu0 %v177
    %540 = vmatprep.subr.mxu0 0.0
    %541 = vmatpush1.msra.mxu0 %v178
    %542 = vmatprep.subr.mxu0 0.0
    %543 = vmatpush1.msra.mxu0 %v179
    %544 = vmatprep.subr.mxu0 0.0
    %545 = vmatpush1.msra.mxu0 0.0
    %546 = vmatprep.subr.mxu0 0.0
    %547 = vmatpush1.msra.mxu0 0.0
    %548 = vmatprep.subr.mxu0 0.0
    %549 = vmatpush1.msra.mxu0 0.0
    %550 = vmatprep.subr.mxu0 0.0
    %551 = vmatpush1.msra.mxu0 0.0
    %552 = vmatprep.subr.mxu0 0.0
    %553 = vmatpush1.msra.mxu0 0.0
    %554 = vmatprep.subr.mxu0 0.0
    %555 = vmatpush1.msra.mxu0 0.0
    %556 = vmatprep.subr.mxu0 0.0
    %557 = vmatpush1.msra.mxu0 0.0
    %558 = vmatprep.subr.mxu0 0.0
    %559 = vmatpush1.msra.mxu0 0.0
    %560 = vmatprep.subr.mxu0 0.0
    %561 = vmatpush1.msra.mxu0 0.0
    %562 = vmatprep.subr.mxu0 0.0
    %563 = vmatpush1.msra.mxu0 0.0
    %564 = vmatprep.subr.mxu0 0.0
    %565 = vmatpush1.msra.mxu0 0.0
    %566 = vmatprep.subr.mxu0 0.0
    %567 = vmatpush1.msra.mxu0 0.0
    %568 = vmatprep.subr.mxu0 0.0
    %569 = vmatpush1.msra.mxu0 0.0
    %570 = vmatprep.subr.mxu0 0.0
    %571 = vmatpush1.msra.mxu0 0.0
    %572 = vmatprep.subr.mxu0 0.0
    %573 = vmatpush1.msra.mxu0 0.0
    %574 = vmatprep.subr.mxu0 0.0
    %575 = vmatpush1.msra.mxu0 0.0
    %576 = vmatprep.subr.mxu0 0.0
    %577 = vmatpush1.msra.mxu0 0.0
    %578 = vmatprep.subr.mxu0 0.0
    %579 = vmatpush1.msra.mxu0 0.0
    %580 = vmatprep.subr.mxu0 0.0
    %581 = vmatpush1.msra.mxu0 0.0
    %582 = vmatprep.subr.mxu0 0.0
    %583 = vmatpush1.msra.mxu0 0.0
    %584 = vmatprep.subr.mxu0 0.0
    %585 = vmatpush1.msra.mxu0 0.0
    %586 = vmatprep.subr.mxu0 0.0
    %587 = vmatpush1.msra.mxu0 0.0
    %588 = vmatprep.subr.mxu0 0.0
    %589 = vmatpush1.msra.mxu0 0.0
    %590 = vmatprep.subr.mxu0 0.0
    %591 = vmatpush1.msra.mxu0 0.0
    %592 = vmatprep.subr.mxu0 0.0
    %593 = vmatpush1.msra.mxu0 0.0
    %594 = vmatprep.subr.mxu0 0.0
    %595 = vmatpush1.msra.mxu0 0.0
    %596 = vmatprep.subr.mxu0 0.0
    %597 = vmatpush1.msra.mxu0 0.0
    %598 = vmatprep.subr.mxu0 0.0
    %599 = vmatpush1.msra.mxu0 0.0
    %600 = vmatprep.mubr.f32.mxu0 0.0
    %601 = vmatmul.mubr.f32.gmra.mrb[0].mxu0 %v534
    %v602 = vpop.f32.mrb[0].mxu0
    %v603 = vadd.f32 %v194, %v602
    %v604 = vpop.f32.mrb[0].mxu0
    %605 = vdwg.mxu0
    %v606 = vadd.f32 %v153, %v603
    %v607 = vxor.u32 %v606, 2147483648
    %v608 = vmul.f32 %v607, 1.442695
    %v609 = vpow.pop %v608
    %v610 = vadd.f32 %v609, 1.0
    %v611 = vrcp.pop %v610
    %v612 = vmul.f32 1.0, %v611
    %614 = vrot.lane.b32.xlu0 %v603, 64
    %v615 = vpop.permute.xlu0 %614
    %v617 = vmul.f32 %v612, %v615
    %619 = vrot.lane.b32.xlu0 %v617, 64
    %v620 = vpop.permute.xlu0 %619
    %v622 = vadd.f32 %v153, %v620
    %v623 = vtanh.pop %v622
    %v624 = vsub.f32 1.0, %v612
    %626 = vrot.lane.b32.xlu0 %v623, 96
    %v627 = vpop.permute.xlu0 %626
    %v629 = vmul.f32 %v624, %v627
    %v630 = vmul.f32 %v612, %v523
    %v631 = vadd.f32 %v629, %v630
    %v632 = vsel %vm185, 1, 0
    %633 = vset.pattern.permute.xlu0 0
    %634 = vperm.xlu0 %633, %v632
    %v635 = vpop.permute.xlu0 %634
    %vm636 = vcmp.eq.s32.totalorder %v635, 1
    %v637 = vsel %vm636, %v631, %v523
    %v638 = vsel %vm636, %v631, 0.0
    %640 = vrot.lane.b32.xlu0 %v638, 96
    %v641 = vpop.permute.xlu0 %640
    %s643 = scalar_lea.vmem [#allocation2], 24
    %644 = vst.msk [vmem:[%s643] sm:$0xff] %vm46, %v641
    %646 = vrot.lane.b32.xlu0 %v637, 96
    %v647 = vpop.permute.xlu0 %646
    %v648 = vsel %vm46, %v647, 0
    %650 = vmatprep.subr.mxu0 0.0
    %651 = vmatpush1.msra.mxu0 %v176
    %652 = vmatprep.subr.mxu0 0.0
    %653 = vmatpush1.msra.mxu0 %v177
    %654 = vmatprep.subr.mxu0 0.0
    %655 = vmatpush1.msra.mxu0 %v178
    %656 = vmatprep.subr.mxu0 0.0
    %657 = vmatpush1.msra.mxu0 %v179
    %658 = vmatprep.subr.mxu0 0.0
    %659 = vmatpush1.msra.mxu0 0.0
    %660 = vmatprep.subr.mxu0 0.0
    %661 = vmatpush1.msra.mxu0 0.0
    %662 = vmatprep.subr.mxu0 0.0
    %663 = vmatpush1.msra.mxu0 0.0
    %664 = vmatprep.subr.mxu0 0.0
    %665 = vmatpush1.msra.mxu0 0.0
    %666 = vmatprep.subr.mxu0 0.0
    %667 = vmatpush1.msra.mxu0 0.0
    %668 = vmatprep.subr.mxu0 0.0
    %669 = vmatpush1.msra.mxu0 0.0
    %670 = vmatprep.subr.mxu0 0.0
    %671 = vmatpush1.msra.mxu0 0.0
    %672 = vmatprep.subr.mxu0 0.0
    %673 = vmatpush1.msra.mxu0 0.0
    %674 = vmatprep.subr.mxu0 0.0
    %675 = vmatpush1.msra.mxu0 0.0
    %676 = vmatprep.subr.mxu0 0.0
    %677 = vmatpush1.msra.mxu0 0.0
    %678 = vmatprep.subr.mxu0 0.0
    %679 = vmatpush1.msra.mxu0 0.0
    %680 = vmatprep.subr.mxu0 0.0
    %681 = vmatpush1.msra.mxu0 0.0
    %682 = vmatprep.subr.mxu0 0.0
    %683 = vmatpush1.msra.mxu0 0.0
    %684 = vmatprep.subr.mxu0 0.0
    %685 = vmatpush1.msra.mxu0 0.0
    %686 = vmatprep.subr.mxu0 0.0
    %687 = vmatpush1.msra.mxu0 0.0
    %688 = vmatprep.subr.mxu0 0.0
    %689 = vmatpush1.msra.mxu0 0.0
    %690 = vmatprep.subr.mxu0 0.0
    %691 = vmatpush1.msra.mxu0 0.0
    %692 = vmatprep.subr.mxu0 0.0
    %693 = vmatpush1.msra.mxu0 0.0
    %694 = vmatprep.subr.mxu0 0.0
    %695 = vmatpush1.msra.mxu0 0.0
    %696 = vmatprep.subr.mxu0 0.0
    %697 = vmatpush1.msra.mxu0 0.0
    %698 = vmatprep.subr.mxu0 0.0
    %699 = vmatpush1.msra.mxu0 0.0
    %700 = vmatprep.subr.mxu0 0.0
    %701 = vmatpush1.msra.mxu0 0.0
    %702 = vmatprep.subr.mxu0 0.0
    %703 = vmatpush1.msra.mxu0 0.0
    %704 = vmatprep.subr.mxu0 0.0
    %705 = vmatpush1.msra.mxu0 0.0
    %706 = vmatprep.subr.mxu0 0.0
    %707 = vmatpush1.msra.mxu0 0.0
    %708 = vmatprep.subr.mxu0 0.0
    %709 = vmatpush1.msra.mxu0 0.0
    %710 = vmatprep.subr.mxu0 0.0
    %711 = vmatpush1.msra.mxu0 0.0
    %712 = vmatprep.subr.mxu0 0.0
    %713 = vmatpush1.msra.mxu0 0.0
    %714 = vmatprep.mubr.f32.mxu0 0.0
    %715 = vmatmul.mubr.f32.gmra.mrb[0].mxu0 %v648
    %v716 = vpop.f32.mrb[0].mxu0
    %v717 = vadd.f32 %v194, %v716
    %v718 = vpop.f32.mrb[0].mxu0
    %719 = vdwg.mxu0
    %v720 = vadd.f32 %v158, %v717
    %v721 = vxor.u32 %v720, 2147483648
    %v722 = vmul.f32 %v721, 1.442695
    %v723 = vpow.pop %v722
    %v724 = vadd.f32 %v723, 1.0
    %v725 = vrcp.pop %v724
    %v726 = vmul.f32 1.0, %v725
    %728 = vrot.lane.b32.xlu0 %v717, 64
    %v729 = vpop.permute.xlu0 %728
    %v731 = vmul.f32 %v726, %v729
    %733 = vrot.lane.b32.xlu0 %v731, 64
    %v734 = vpop.permute.xlu0 %733
    %v736 = vadd.f32 %v158, %v734
    %v737 = vtanh.pop %v736
    %v738 = vsub.f32 1.0, %v726
    %740 = vrot.lane.b32.xlu0 %v737, 96
    %v741 = vpop.permute.xlu0 %740
    %v743 = vmul.f32 %v738, %v741
    %v744 = vmul.f32 %v726, %v637
    %v745 = vadd.f32 %v743, %v744
    %v746 = vsel %vm186, 1, 0
    %747 = vset.pattern.permute.xlu0 0
    %748 = vperm.xlu0 %747, %v746
    %v749 = vpop.permute.xlu0 %748
    %vm750 = vcmp.eq.s32.totalorder %v749, 1
    %v751 = vsel %vm750, %v745, %v637
    %v752 = vsel %vm750, %v745, 0.0
    %754 = vrot.lane.b32.xlu0 %v752, 96
    %v755 = vpop.permute.xlu0 %754
    %s757 = scalar_lea.vmem [#allocation2], 32
    %758 = vst.msk [vmem:[%s757] sm:$0xff] %vm46, %v755
    %760 = vrot.lane.b32.xlu0 %v751, 96
    %v761 = vpop.permute.xlu0 %760
    %v762 = vsel %vm46, %v761, 0
    %764 = vmatprep.subr.mxu0 0.0
    %765 = vmatpush1.msra.mxu0 %v176
    %766 = vmatprep.subr.mxu0 0.0
    %767 = vmatpush1.msra.mxu0 %v177
    %768 = vmatprep.subr.mxu0 0.0
    %769 = vmatpush1.msra.mxu0 %v178
    %770 = vmatprep.subr.mxu0 0.0
    %771 = vmatpush1.msra.mxu0 %v179
    %772 = vmatprep.subr.mxu0 0.0
    %773 = vmatpush1.msra.mxu0 0.0
    %774 = vmatprep.subr.mxu0 0.0
    %775 = vmatpush1.msra.mxu0 0.0
    %776 = vmatprep.subr.mxu0 0.0
    %777 = vmatpush1.msra.mxu0 0.0
    %778 = vmatprep.subr.mxu0 0.0
    %779 = vmatpush1.msra.mxu0 0.0
    %780 = vmatprep.subr.mxu0 0.0
    %781 = vmatpush1.msra.mxu0 0.0
    %782 = vmatprep.subr.mxu0 0.0
    %783 = vmatpush1.msra.mxu0 0.0
    %784 = vmatprep.subr.mxu0 0.0
    %785 = vmatpush1.msra.mxu0 0.0
    %786 = vmatprep.subr.mxu0 0.0
    %787 = vmatpush1.msra.mxu0 0.0
    %788 = vmatprep.subr.mxu0 0.0
    %789 = vmatpush1.msra.mxu0 0.0
    %790 = vmatprep.subr.mxu0 0.0
    %791 = vmatpush1.msra.mxu0 0.0
    %792 = vmatprep.subr.mxu0 0.0
    %793 = vmatpush1.msra.mxu0 0.0
    %794 = vmatprep.subr.mxu0 0.0
    %795 = vmatpush1.msra.mxu0 0.0
    %796 = vmatprep.subr.mxu0 0.0
    %797 = vmatpush1.msra.mxu0 0.0
    %798 = vmatprep.subr.mxu0 0.0
    %799 = vmatpush1.msra.mxu0 0.0
    %800 = vmatprep.subr.mxu0 0.0
    %801 = vmatpush1.msra.mxu0 0.0
    %802 = vmatprep.subr.mxu0 0.0
    %803 = vmatpush1.msra.mxu0 0.0
    %804 = vmatprep.subr.mxu0 0.0
    %805 = vmatpush1.msra.mxu0 0.0
    %806 = vmatprep.subr.mxu0 0.0
    %807 = vmatpush1.msra.mxu0 0.0
    %808 = vmatprep.subr.mxu0 0.0
    %809 = vmatpush1.msra.mxu0 0.0
    %810 = vmatprep.subr.mxu0 0.0
    %811 = vmatpush1.msra.mxu0 0.0
    %812 = vmatprep.subr.mxu0 0.0
    %813 = vmatpush1.msra.mxu0 0.0
    %814 = vmatprep.subr.mxu0 0.0
    %815 = vmatpush1.msra.mxu0 0.0
    %816 = vmatprep.subr.mxu0 0.0
    %817 = vmatpush1.msra.mxu0 0.0
    %818 = vmatprep.subr.mxu0 0.0
    %819 = vmatpush1.msra.mxu0 0.0
    %820 = vmatprep.subr.mxu0 0.0
    %821 = vmatpush1.msra.mxu0 0.0
    %822 = vmatprep.subr.mxu0 0.0
    %823 = vmatpush1.msra.mxu0 0.0
    %824 = vmatprep.subr.mxu0 0.0
    %825 = vmatpush1.msra.mxu0 0.0
    %826 = vmatprep.subr.mxu0 0.0
    %827 = vmatpush1.msra.mxu0 0.0
    %828 = vmatprep.mubr.f32.mxu0 0.0
    %829 = vmatmul.mubr.f32.gmra.mrb[0].mxu0 %v762
    %v830 = vpop.f32.mrb[0].mxu0
    %v831 = vadd.f32 %v194, %v830
    %v832 = vpop.f32.mrb[0].mxu0
    %833 = vdwg.mxu0
    %v834 = vadd.f32 %v163, %v831
    %v835 = vxor.u32 %v834, 2147483648
    %v836 = vmul.f32 %v835, 1.442695
    %v837 = vpow.pop %v836
    %v838 = vadd.f32 %v837, 1.0
    %v839 = vrcp.pop %v838
    %v840 = vmul.f32 1.0, %v839
    %842 = vrot.lane.b32.xlu0 %v831, 64
    %v843 = vpop.permute.xlu0 %842
    %v845 = vmul.f32 %v840, %v843
    %847 = vrot.lane.b32.xlu0 %v845, 64
    %v848 = vpop.permute.xlu0 %847
    %v850 = vadd.f32 %v163, %v848
    %v851 = vtanh.pop %v850
    %v852 = vsub.f32 1.0, %v840
    %854 = vrot.lane.b32.xlu0 %v851, 96
    %v855 = vpop.permute.xlu0 %854
    %v857 = vmul.f32 %v852, %v855
    %v858 = vmul.f32 %v840, %v751
    %v859 = vadd.f32 %v857, %v858
    %v860 = vsel %vm187, 1, 0
    %861 = vset.pattern.permute.xlu0 0
    %862 = vperm.xlu0 %861, %v860
    %v863 = vpop.permute.xlu0 %862
    %vm864 = vcmp.eq.s32.totalorder %v863, 1
    %v865 = vsel %vm864, %v859, %v751
    %v866 = vsel %vm864, %v859, 0.0
    %868 = vrot.lane.b32.xlu0 %v866, 96
    %v869 = vpop.permute.xlu0 %868
    %s871 = scalar_lea.vmem [#allocation2], 40
    %872 = vst.msk [vmem:[%s871] sm:$0xff] %vm46, %v869
    %874 = vrot.lane.b32.xlu0 %v865, 96
    %v875 = vpop.permute.xlu0 %874
    %v876 = vsel %vm46, %v875, 0
    %878 = vmatprep.subr.mxu0 0.0
    %879 = vmatpush1.msra.mxu0 %v176
    %880 = vmatprep.subr.mxu0 0.0
    %881 = vmatpush1.msra.mxu0 %v177
    %882 = vmatprep.subr.mxu0 0.0
    %883 = vmatpush1.msra.mxu0 %v178
    %884 = vmatprep.subr.mxu0 0.0
    %885 = vmatpush1.msra.mxu0 %v179
    %886 = vmatprep.subr.mxu0 0.0
    %887 = vmatpush1.msra.mxu0 0.0
    %888 = vmatprep.subr.mxu0 0.0
    %889 = vmatpush1.msra.mxu0 0.0
    %890 = vmatprep.subr.mxu0 0.0
    %891 = vmatpush1.msra.mxu0 0.0
    %892 = vmatprep.subr.mxu0 0.0
    %893 = vmatpush1.msra.mxu0 0.0
    %894 = vmatprep.subr.mxu0 0.0
    %895 = vmatpush1.msra.mxu0 0.0
    %896 = vmatprep.subr.mxu0 0.0
    %897 = vmatpush1.msra.mxu0 0.0
    %898 = vmatprep.subr.mxu0 0.0
    %899 = vmatpush1.msra.mxu0 0.0
    %900 = vmatprep.subr.mxu0 0.0
    %901 = vmatpush1.msra.mxu0 0.0
    %902 = vmatprep.subr.mxu0 0.0
    %903 = vmatpush1.msra.mxu0 0.0
    %904 = vmatprep.subr.mxu0 0.0
    %905 = vmatpush1.msra.mxu0 0.0
    %906 = vmatprep.subr.mxu0 0.0
    %907 = vmatpush1.msra.mxu0 0.0
    %908 = vmatprep.subr.mxu0 0.0
    %909 = vmatpush1.msra.mxu0 0.0
    %910 = vmatprep.subr.mxu0 0.0
    %911 = vmatpush1.msra.mxu0 0.0
    %912 = vmatprep.subr.mxu0 0.0
    %913 = vmatpush1.msra.mxu0 0.0
    %914 = vmatprep.subr.mxu0 0.0
    %915 = vmatpush1.msra.mxu0 0.0
    %916 = vmatprep.subr.mxu0 0.0
    %917 = vmatpush1.msra.mxu0 0.0
    %918 = vmatprep.subr.mxu0 0.0
    %919 = vmatpush1.msra.mxu0 0.0
    %920 = vmatprep.subr.mxu0 0.0
    %921 = vmatpush1.msra.mxu0 0.0
    %922 = vmatprep.subr.mxu0 0.0
    %923 = vmatpush1.msra.mxu0 0.0
    %924 = vmatprep.subr.mxu0 0.0
    %925 = vmatpush1.msra.mxu0 0.0
    %926 = vmatprep.subr.mxu0 0.0
    %927 = vmatpush1.msra.mxu0 0.0
    %928 = vmatprep.subr.mxu0 0.0
    %929 = vmatpush1.msra.mxu0 0.0
    %930 = vmatprep.subr.mxu0 0.0
    %931 = vmatpush1.msra.mxu0 0.0
    %932 = vmatprep.subr.mxu0 0.0
    %933 = vmatpush1.msra.mxu0 0.0
    %934 = vmatprep.subr.mxu0 0.0
    %935 = vmatpush1.msra.mxu0 0.0
    %936 = vmatprep.subr.mxu0 0.0
    %937 = vmatpush1.msra.mxu0 0.0
    %938 = vmatprep.subr.mxu0 0.0
    %939 = vmatpush1.msra.mxu0 0.0
    %940 = vmatprep.subr.mxu0 0.0
    %941 = vmatpush1.msra.mxu0 0.0
    %942 = vmatprep.mubr.f32.mxu0 0.0
    %943 = vmatmul.mubr.f32.gmra.mrb[0].mxu0 %v876
    %v944 = vpop.f32.mrb[0].mxu0
    %v945 = vadd.f32 %v194, %v944
    %v946 = vpop.f32.mrb[0].mxu0
    %947 = vdwg.mxu0
    %v948 = vadd.f32 %v168, %v945
    %v949 = vxor.u32 %v948, 2147483648
    %v950 = vmul.f32 %v949, 1.442695
    %v951 = vpow.pop %v950
    %v952 = vadd.f32 %v951, 1.0
    %v953 = vrcp.pop %v952
    %v954 = vmul.f32 1.0, %v953
    %956 = vrot.lane.b32.xlu0 %v945, 64
    %v957 = vpop.permute.xlu0 %956
    %v959 = vmul.f32 %v954, %v957
    %961 = vrot.lane.b32.xlu0 %v959, 64
    %v962 = vpop.permute.xlu0 %961
    %v964 = vadd.f32 %v168, %v962
    %v965 = vtanh.pop %v964
    %v966 = vsub.f32 1.0, %v954
    %968 = vrot.lane.b32.xlu0 %v965, 96
    %v969 = vpop.permute.xlu0 %968
    %v971 = vmul.f32 %v966, %v969
    %v972 = vmul.f32 %v954, %v865
    %v973 = vadd.f32 %v971, %v972
    %v974 = vsel %vm188, 1, 0
    %975 = vset.pattern.permute.xlu0 0
    %976 = vperm.xlu0 %975, %v974
    %v977 = vpop.permute.xlu0 %976
    %vm978 = vcmp.eq.s32.totalorder %v977, 1
    %v979 = vsel %vm978, %v973, %v865
    %v980 = vsel %vm978, %v973, 0.0
    %982 = vrot.lane.b32.xlu0 %v980, 96
    %v983 = vpop.permute.xlu0 %982
    %s985 = scalar_lea.vmem [#allocation2], 48
    %986 = vst.msk [vmem:[%s985] sm:$0xff] %vm46, %v983
    %988 = vrot.lane.b32.xlu0 %v979, 96
    %v989 = vpop.permute.xlu0 %988
    %v990 = vsel %vm46, %v989, 0
    %992 = vmatprep.subr.mxu0 0.0
    %993 = vmatpush1.msra.mxu0 %v176
    %994 = vmatprep.subr.mxu0 0.0
    %995 = vmatpush1.msra.mxu0 %v177
    %996 = vmatprep.subr.mxu0 0.0
    %997 = vmatpush1.msra.mxu0 %v178
    %998 = vmatprep.subr.mxu0 0.0
    %999 = vmatpush1.msra.mxu0 %v179
    %1000 = vmatprep.subr.mxu0 0.0
    %1001 = vmatpush1.msra.mxu0 0.0
    %1002 = vmatprep.subr.mxu0 0.0
    %1003 = vmatpush1.msra.mxu0 0.0
    %1004 = vmatprep.subr.mxu0 0.0
    %1005 = vmatpush1.msra.mxu0 0.0
    %1006 = vmatprep.subr.mxu0 0.0
    %1007 = vmatpush1.msra.mxu0 0.0
    %1008 = vmatprep.subr.mxu0 0.0
    %1009 = vmatpush1.msra.mxu0 0.0
    %1010 = vmatprep.subr.mxu0 0.0
    %1011 = vmatpush1.msra.mxu0 0.0
    %1012 = vmatprep.subr.mxu0 0.0
    %1013 = vmatpush1.msra.mxu0 0.0
    %1014 = vmatprep.subr.mxu0 0.0
    %1015 = vmatpush1.msra.mxu0 0.0
    %1016 = vmatprep.subr.mxu0 0.0
    %1017 = vmatpush1.msra.mxu0 0.0
    %1018 = vmatprep.subr.mxu0 0.0
    %1019 = vmatpush1.msra.mxu0 0.0
    %1020 = vmatprep.subr.mxu0 0.0
    %1021 = vmatpush1.msra.mxu0 0.0
    %1022 = vmatprep.subr.mxu0 0.0
    %1023 = vmatpush1.msra.mxu0 0.0
    %1024 = vmatprep.subr.mxu0 0.0
    %1025 = vmatpush1.msra.mxu0 0.0
    %1026 = vmatprep.subr.mxu0 0.0
    %1027 = vmatpush1.msra.mxu0 0.0
    %1028 = vmatprep.subr.mxu0 0.0
    %1029 = vmatpush1.msra.mxu0 0.0
    %1030 = vmatprep.subr.mxu0 0.0
    %1031 = vmatpush1.msra.mxu0 0.0
    %1032 = vmatprep.subr.mxu0 0.0
    %1033 = vmatpush1.msra.mxu0 0.0
    %1034 = vmatprep.subr.mxu0 0.0
    %1035 = vmatpush1.msra.mxu0 0.0
    %1036 = vmatprep.subr.mxu0 0.0
    %1037 = vmatpush1.msra.mxu0 0.0
    %1038 = vmatprep.subr.mxu0 0.0
    %1039 = vmatpush1.msra.mxu0 0.0
    %1040 = vmatprep.subr.mxu0 0.0
    %1041 = vmatpush1.msra.mxu0 0.0
    %1042 = vmatprep.subr.mxu0 0.0
    %1043 = vmatpush1.msra.mxu0 0.0
    %1044 = vmatprep.subr.mxu0 0.0
    %1045 = vmatpush1.msra.mxu0 0.0
    %1046 = vmatprep.subr.mxu0 0.0
    %1047 = vmatpush1.msra.mxu0 0.0
    %1048 = vmatprep.subr.mxu0 0.0
    %1049 = vmatpush1.msra.mxu0 0.0
    %1050 = vmatprep.subr.mxu0 0.0
    %1051 = vmatpush1.msra.mxu0 0.0
    %1052 = vmatprep.subr.mxu0 0.0
    %1053 = vmatpush1.msra.mxu0 0.0
    %1054 = vmatprep.subr.mxu0 0.0
    %1055 = vmatpush1.msra.mxu0 0.0
    %1056 = vmatprep.mubr.f32.mxu0 0.0
    %1057 = vmatmul.mubr.f32.gmra.mrb[0].mxu0 %v990
    %v1058 = vpop.f32.mrb[0].mxu0
    %v1059 = vadd.f32 %v194, %v1058
    %v1060 = vpop.f32.mrb[0].mxu0
    %1061 = vdwg.mxu0
    %v1062 = vadd.f32 %v173, %v1059
    %v1063 = vxor.u32 %v1062, 2147483648
    %v1064 = vmul.f32 %v1063, 1.442695
    %v1065 = vpow.pop %v1064
    %v1066 = vadd.f32 %v1065, 1.0
    %v1067 = vrcp.pop %v1066
    %v1068 = vmul.f32 1.0, %v1067
    %1070 = vrot.lane.b32.xlu0 %v1059, 64
    %v1071 = vpop.permute.xlu0 %1070
    %v1073 = vmul.f32 %v1068, %v1071
    %1075 = vrot.lane.b32.xlu0 %v1073, 64
    %v1076 = vpop.permute.xlu0 %1075
    %v1078 = vadd.f32 %v173, %v1076
    %v1079 = vtanh.pop %v1078
    %v1080 = vsub.f32 1.0, %v1068
    %1082 = vrot.lane.b32.xlu0 %v1079, 96
    %v1083 = vpop.permute.xlu0 %1082
    %v1085 = vmul.f32 %v1080, %v1083
    %v1086 = vmul.f32 %v1068, %v979
    %v1087 = vadd.f32 %v1085, %v1086
    %v1088 = vsel %vm189, 1, 0
    %1089 = vset.pattern.permute.xlu0 0
    %1090 = vperm.xlu0 %1089, %v1088
    %v1091 = vpop.permute.xlu0 %1090
    %vm1092 = vcmp.eq.s32.totalorder %v1091, 1
    %v1093 = vsel %vm1092, %v1087, %v979
    %v1094 = vsel %vm1092, %v1087, 0.0
    %1096 = vrot.lane.b32.xlu0 %v1094, 96
    %v1097 = vpop.permute.xlu0 %1096
    %s1099 = scalar_lea.vmem [#allocation2], 56
    %1100 = vst.msk [vmem:[%s1099] sm:$0xff] %vm46, %v1097
    %1102 = vrot.lane.b32.xlu0 %v1093, 96
    %v1103 = vpop.permute.xlu0 %1102
    %1105 = vst.msk [vmem:[#allocation4] sm:$0xff] %vm46, %v1103
    // Predicated region
    $region26: #{normal_encoder_forward.1} parent=1 // pred_check
      _
    $region27: #{normal_encoder_forward.1} parent=1 // pred_check_branch
      %1107 = sbr.rel (0) target = $region29
    $region28: #{normal_encoder_forward.1} parent=1 // pred_region
      %s1109 = ssub.s32 1024, 1024
      %1110 = vsyncadd [#allocation3], %s1109
      %s1111 = sshll.u32 [#allocation2], 4
      %s1112 = int_to_ptr.vmem [resolvable:$true] %s1111
      %1117 = dma.vmem_to_hbm [thread:$0]  %s1112, 1024, %s6, [#allocation3], 128, 128, 8
    $region29: #{normal_encoder_forward.1} parent=1 // pred_fallthru
      _
    // Predicated region
    $region30: #{normal_encoder_forward.1} parent=1 // pred_check
      _
    $region31: #{normal_encoder_forward.1} parent=1 // pred_check_branch
      %1119 = sbr.rel (0) target = $region33
    $region32: #{normal_encoder_forward.1} parent=1 // pred_region
      %s1121 = ssub.s32 128, 128
      %1122 = vsyncadd [#allocation5], %s1121
      %s1124 = sshll.u32 [#allocation4], 4
      %s1125 = int_to_ptr.vmem [resolvable:$true] %s1124
      %1127 = dma.vmem_to_hbm [thread:$0]  %s1125, 128, %s7, [#allocation5]
    $region33: #{normal_encoder_forward.1} parent=1 // pred_fallthru
      _
    // Predicated region
    $region34: #{normal_encoder_forward.1} parent=1 // pred_check
      _
    $region35: #{normal_encoder_forward.1} parent=1 // pred_check_branch
      %1129 = sbr.rel (0) target = $region37
    $region36: #{normal_encoder_forward.1} parent=1 // pred_region
      %1130 = dma.done [#allocation3], 1024
    $region37: #{normal_encoder_forward.1} parent=1 // pred_fallthru
      _
    // Predicated region
    $region38: #{normal_encoder_forward.1} parent=1 // pred_check
      _
    $region39: #{normal_encoder_forward.1} parent=1 // pred_check_branch
      %1132 = sbr.rel (0) target = $region41
    $region40: #{normal_encoder_forward.1} parent=1 // pred_region
      %1133 = dma.done [#allocation5], 128
    $region41: #{normal_encoder_forward.1} parent=1 // pred_fallthru
      _
    %1134 = vsyncpa [#allocation3], 1
    %1135 = vsyncpa [#allocation5], 1

</llo_original>
